<compile_context>
chip_gen: v7x
topology: tpu7x:2x2x1
jax: 0.10.0
libtpu: 0.0.40
codegen_flags: <defaults>
</compile_context>

<pallas_src>
import functools

import jax
import jax.numpy as jnp
from jax.experimental import pallas as pl
from jax.experimental.pallas import tpu as pltpu

IN_DIM = 28 * 28          # 784 (== full last dim of x, no K padding needed)
H1 = 512
H2 = 256
CLASSES = 10
CLASSES_PAD = 128         # lane-dense padded logits (never go below 128 lanes)
TM_MAX = 512              # max batch tile; bump to 1024 for very large batches


def mlp_kernel(x_ref, w1_ref, b1_ref, w2_ref, b2_ref, w3_ref, b3_ref, o_ref):
    # Cast the streamed activations to bf16 on-chip (cheap VPU work).
    x = x_ref[...].astype(jnp.bfloat16)
    # Layer 1: (tm,784)bf16 @ (784,512)bf16 -> f32 acc, +bias, ReLU
    h1 = jnp.dot(x, w1_ref[...], preferred_element_type=jnp.float32)
    h1 = jnp.maximum(h1 + b1_ref[...], 0.0).astype(jnp.bfloat16)
    # Layer 2: (tm,512) @ (512,256)
    h2 = jnp.dot(h1, w2_ref[...], preferred_element_type=jnp.float32)
    h2 = jnp.maximum(h2 + b2_ref[...], 0.0).astype(jnp.bfloat16)
    # Layer 3: (tm,256) @ (256,128pad) + bias (pad columns are exact zeros)
    logits = jnp.dot(h2, w3_ref[...], preferred_element_type=jnp.float32) + b3_ref[...]
    o_ref[...] = logits.astype(o_ref.dtype)   # bf16 lane-dense writeback


def prepare_params(params):
    """One-time bf16 cast + logit-column padding of weights (off the hot path)."""
    w1, b1, w2, b2, w3, b3 = params
    w1_p = w1.astype(jnp.bfloat16)                                   # (784, 512)
    w2_p = w2.astype(jnp.bfloat16)                                   # (512, 256)
    w3_p = (jnp.zeros((H2, CLASSES_PAD), jnp.float32)
            .at[:, :CLASSES].set(w3).astype(jnp.bfloat16))           # (256, 128)
    b3_p = jnp.zeros((1, CLASSES_PAD), jnp.float32).at[:, :CLASSES].set(b3)
    return (w1_p, b1.astype(jnp.float32), w2_p, b2.astype(jnp.float32), w3_p, b3_p)


def _select_tile_m(batch, tm_max):
    """Largest 128-multiple tile <= tm_max, clamped so the parallel grid has
    >= 2 steps whenever the batch allows (keeps both v7x TensorCores busy)."""
    b128 = ((batch + 127) // 128) * 128
    tm = min(tm_max, max(128, b128 // 2))
    tm = max(128, (tm // 128) * 128)
    return tm


@functools.partial(jax.jit, static_argnames=("tm_max", "full_output"))
def mlp_forward(x, prepared, tm_max=TM_MAX, full_output=False):
    """x: (B, 784) float32 (or bf16) -> logits (B, CLASSES) float32.

    With full_output=True, returns the padded (B_pad, 128) bf16 slab so a
    downstream consumer can fuse the slice itself (no extra wrapper pass).
    """
    w1_p, b1, w2_p, b2, w3_p, b3_p = prepared
    B = x.shape[0]
    tm = _select_tile_m(B, tm_max)
    B_pad = pl.cdiv(B, tm) * tm

    # Only the (cheap) batch-row padding remains, and only if actually needed.
    if B_pad != B:
        x = jnp.pad(x, ((0, B_pad - B), (0, 0)))

    resident = lambda i: (0, 0)   # weights/biases: same block every step -> VMEM-resident

    out_p = pl.pallas_call(
        mlp_kernel,
        out_shape=jax.ShapeDtypeStruct((B_pad, CLASSES_PAD), jnp.bfloat16),
        grid=(B_pad // tm,),
        in_specs=[
            pl.BlockSpec((tm, IN_DIM), lambda i: (i, 0)),       # x tile, pipelined
            pl.BlockSpec((IN_DIM, H1), resident),               # w1 (784, 512) bf16
            pl.BlockSpec((1, H1), resident),                    # b1 f32
            pl.BlockSpec((H1, H2), resident),                   # w2 bf16
            pl.BlockSpec((1, H2), resident),                    # b2 f32
            pl.BlockSpec((H2, CLASSES_PAD), resident),          # w3 (256, 128) bf16
            pl.BlockSpec((1, CLASSES_PAD), resident),           # b3 (1, 128) f32
        ],
        out_specs=pl.BlockSpec((tm, CLASSES_PAD), lambda i: (i, 0)),
        compiler_params=pltpu.CompilerParams(
            dimension_semantics=("parallel",),   # shards batch tiles across TCs on v7x
            vmem_limit_bytes=32 << 20,
        ),
    )(x, w1_p, b1, w2_p, b2, w3_p, b3_p)

    if full_output:
        return out_p
    return out_p[:B, :CLASSES].astype(jnp.float32)


def init_params(key):
    """Deterministic init mirroring PyTorch Linear shapes, stored as (in, out)."""
    k1, k2, k3, k4, k5, k6 = jax.random.split(key, 6)

    def lin(kw, kb, fan_in, fan_out):
        bound = 1.0 / jnp.sqrt(fan_in)
        w = jax.random.uniform(kw, (fan_in, fan_out), jnp.float32, -bound, bound)
        b = jax.random.uniform(kb, (1, fan_out), jnp.float32, -bound, bound)
        return w, b

    w1, b1 = lin(k1, k2, IN_DIM, H1)
    w2, b2 = lin(k3, k4, H1, H2)
    w3, b3 = lin(k5, k6, H2, CLASSES)
    return (w1, b1, w2, b2, w3, b3)


def mlp_reference(x, params):
    """Pure-JAX reference emulating bf16 operands / f32 accumulation / bf16 out."""
    w1, b1, w2, b2, w3, b3 = params
    bf = lambda a: a.astype(jnp.bfloat16).astype(jnp.float32)
    h1 = jnp.maximum(bf(x) @ bf(w1) + b1, 0.0)
    h2 = jnp.maximum(bf(h1) @ bf(w2) + b2, 0.0)
    out = bf(h2) @ bf(w3) + b3
    return out.astype(jnp.bfloat16).astype(jnp.float32)


if __name__ == "__main__":
    key = jax.random.PRNGKey(0)
    kx, kp = jax.random.split(key)

    params = init_params(kp)
    prepared = prepare_params(params)

    # Small demo batch (pads internally to one 128-row tile).
    B = 8
    x = jax.random.normal(kx, (B, IN_DIM), jnp.float32)
    out = jax.block_until_ready(mlp_forward(x, prepared))
    ref = mlp_reference(x, params)
    assert out.shape == (B, CLASSES), out.shape
    assert jnp.allclose(out, ref, atol=2e-2, rtol=2e-2), "mismatch vs reference (B=8)"

    # Secondary check: batch that exercises multi-step grid + row padding.
    B2 = 300
    x2 = jax.random.normal(kx, (B2, IN_DIM), jnp.float32)
    out2 = jax.block_until_ready(mlp_forward(x2, prepared))
    ref2 = mlp_reference(x2, params)
    assert out2.shape == (B2, CLASSES), out2.shape
    assert jnp.allclose(out2, ref2, atol=2e-2, rtol=2e-2), "mismatch vs reference (B=300)"

    print("KERNEL_OK")
</pallas_src>

<mosaic_0001>
module attributes {stable_mosaic.version = 11 : i64} {
  func.func @mlp_kernel(%arg0: i32, %arg1: memref<128x784xf32, #tpu.memory_space<vmem>>, %arg2: memref<784x512xbf16, #tpu.memory_space<vmem>>, %arg3: memref<1x512xf32, #tpu.memory_space<vmem>>, %arg4: memref<512x256xbf16, #tpu.memory_space<vmem>>, %arg5: memref<1x256xf32, #tpu.memory_space<vmem>>, %arg6: memref<256x128xbf16, #tpu.memory_space<vmem>>, %arg7: memref<1x128xf32, #tpu.memory_space<vmem>>, %arg8: memref<128x128xbf16, #tpu.memory_space<vmem>>) attributes {dimension_semantics = [#tpu.dimension_semantics<parallel>], iteration_bounds = array<i64: 1>, scalar_prefetch = 0 : i64, scratch_operands = 0 : i64, tpu.core_type = #tpu.core_type<tc>, window_params = [{transform_indices = @transform_0, window_bounds = array<i64: 128, 784>}, {pipeline_mode = #tpu.pipeline_mode<synchronous>, transform_indices = @transform_1, window_bounds = array<i64: 784, 512>}, {pipeline_mode = #tpu.pipeline_mode<synchronous>, transform_indices = @transform_2, window_bounds = array<i64: 1, 512>}, {pipeline_mode = #tpu.pipeline_mode<synchronous>, transform_indices = @transform_3, window_bounds = array<i64: 512, 256>}, {pipeline_mode = #tpu.pipeline_mode<synchronous>, transform_indices = @transform_4, window_bounds = array<i64: 1, 256>}, {pipeline_mode = #tpu.pipeline_mode<synchronous>, transform_indices = @transform_5, window_bounds = array<i64: 256, 128>}, {pipeline_mode = #tpu.pipeline_mode<synchronous>, transform_indices = @transform_6, window_bounds = array<i64: 1, 128>}, {transform_indices = @transform_7, window_bounds = array<i64: 128, 128>}]} {
    %c0 = arith.constant 0 : index
    %c0_0 = arith.constant 0 : index
    %0 = vector.load %arg1[%c0, %c0_0] : memref<128x784xf32, #tpu.memory_space<vmem>>, vector<128x784xf32>
    %1 = arith.truncf %0 : vector<128x784xf32> to vector<128x784xbf16>
    %c0_1 = arith.constant 0 : index
    %c0_2 = arith.constant 0 : index
    %2 = vector.load %arg2[%c0_1, %c0_2] : memref<784x512xbf16, #tpu.memory_space<vmem>>, vector<784x512xbf16>
    %cst = arith.constant dense<0.000000e+00> : vector<128x512xf32>
    %3 = tpu.matmul %1, %2, %cst {dimension_numbers = #tpu.dot_dimension_numbers<[1], [0], [0], [1], [0, 0, 1, 1], [], []>} : vector<128x784xbf16>, vector<784x512xbf16>, vector<128x512xf32> -> vector<128x512xf32>
    %c0_3 = arith.constant 0 : index
    %c0_4 = arith.constant 0 : index
    %4 = vector.load %arg3[%c0_3, %c0_4] : memref<1x512xf32, #tpu.memory_space<vmem>>, vector<1x512xf32>
    %5 = vector.broadcast %4 : vector<1x512xf32> to vector<128x512xf32>
    %6 = arith.addf %3, %5 : vector<128x512xf32>
    %cst_5 = arith.constant 0.000000e+00 : f32
    %7 = vector.broadcast %cst_5 : f32 to vector<128x512xf32>
    %8 = arith.maximumf %6, %7 : vector<128x512xf32>
    %9 = arith.truncf %8 : vector<128x512xf32> to vector<128x512xbf16>
    %c0_6 = arith.constant 0 : index
    %c0_7 = arith.constant 0 : index
    %10 = vector.load %arg4[%c0_6, %c0_7] : memref<512x256xbf16, #tpu.memory_space<vmem>>, vector<512x256xbf16>
    %cst_8 = arith.constant dense<0.000000e+00> : vector<128x256xf32>
    %11 = tpu.matmul %9, %10, %cst_8 {dimension_numbers = #tpu.dot_dimension_numbers<[1], [0], [0], [1], [0, 0, 1, 1], [], []>} : vector<128x512xbf16>, vector<512x256xbf16>, vector<128x256xf32> -> vector<128x256xf32>
    %c0_9 = arith.constant 0 : index
    %c0_10 = arith.constant 0 : index
    %12 = vector.load %arg5[%c0_9, %c0_10] : memref<1x256xf32, #tpu.memory_space<vmem>>, vector<1x256xf32>
    %13 = vector.broadcast %12 : vector<1x256xf32> to vector<128x256xf32>
    %14 = arith.addf %11, %13 : vector<128x256xf32>
    %cst_11 = arith.constant 0.000000e+00 : f32
    %15 = vector.broadcast %cst_11 : f32 to vector<128x256xf32>
    %16 = arith.maximumf %14, %15 : vector<128x256xf32>
    %17 = arith.truncf %16 : vector<128x256xf32> to vector<128x256xbf16>
    %c0_12 = arith.constant 0 : index
    %c0_13 = arith.constant 0 : index
    %18 = vector.load %arg6[%c0_12, %c0_13] : memref<256x128xbf16, #tpu.memory_space<vmem>>, vector<256x128xbf16>
    %cst_14 = arith.constant dense<0.000000e+00> : vector<128x128xf32>
    %19 = tpu.matmul %17, %18, %cst_14 {dimension_numbers = #tpu.dot_dimension_numbers<[1], [0], [0], [1], [0, 0, 1, 1], [], []>} : vector<128x256xbf16>, vector<256x128xbf16>, vector<128x128xf32> -> vector<128x128xf32>
    %c0_15 = arith.constant 0 : index
    %c0_16 = arith.constant 0 : index
    %20 = vector.load %arg7[%c0_15, %c0_16] : memref<1x128xf32, #tpu.memory_space<vmem>>, vector<1x128xf32>
    %21 = vector.broadcast %20 : vector<1x128xf32> to vector<128x128xf32>
    %22 = arith.addf %19, %21 : vector<128x128xf32>
    %23 = arith.truncf %22 : vector<128x128xf32> to vector<128x128xbf16>
    %c0_17 = arith.constant 0 : index
    %c0_18 = arith.constant 0 : index
    %24 = vector.load %arg8[%c0_17, %c0_18] : memref<128x128xbf16, #tpu.memory_space<vmem>>, vector<128x128xbf16>
    tpu.vector_store %arg8[%c0_17, %c0_18], %23 {strides = array<i32>} : memref<128x128xbf16, #tpu.memory_space<vmem>>, vector<128x128xbf16>,
    return
  }
  func.func @transform_0(%arg0: i32) -> (i32, i32) {
    %c0_i32 = arith.constant 0 : i32
    %c0_i32_0 = arith.constant 0 : i32
    return %arg0, %c0_i32 : i32, i32
  }
  func.func @transform_1(%arg0: i32) -> (i32, i32) {
    %c0_i32 = arith.constant 0 : i32
    %c0_i32_0 = arith.constant 0 : i32
    %c0_i32_1 = arith.constant 0 : i32
    return %c0_i32, %c0_i32_0 : i32, i32
  }
  func.func @transform_2(%arg0: i32) -> (i32, i32) {
    %c0_i32 = arith.constant 0 : i32
    %c0_i32_0 = arith.constant 0 : i32
    %c0_i32_1 = arith.constant 0 : i32
    return %c0_i32, %c0_i32_0 : i32, i32
  }
  func.func @transform_3(%arg0: i32) -> (i32, i32) {
    %c0_i32 = arith.constant 0 : i32
    %c0_i32_0 = arith.constant 0 : i32
    %c0_i32_1 = arith.constant 0 : i32
    return %c0_i32, %c0_i32_0 : i32, i32
  }
  func.func @transform_4(%arg0: i32) -> (i32, i32) {
    %c0_i32 = arith.constant 0 : i32
    %c0_i32_0 = arith.constant 0 : i32
    %c0_i32_1 = arith.constant 0 : i32
    return %c0_i32, %c0_i32_0 : i32, i32
  }
  func.func @transform_5(%arg0: i32) -> (i32, i32) {
    %c0_i32 = arith.constant 0 : i32
    %c0_i32_0 = arith.constant 0 : i32
    %c0_i32_1 = arith.constant 0 : i32
    return %c0_i32, %c0_i32_0 : i32, i32
  }
  func.func @transform_6(%arg0: i32) -> (i32, i32) {
    %c0_i32 = arith.constant 0 : i32
    %c0_i32_0 = arith.constant 0 : i32
    %c0_i32_1 = arith.constant 0 : i32
    return %c0_i32, %c0_i32_0 : i32, i32
  }
  func.func @transform_7(%arg0: i32) -> (i32, i32) {
    %c0_i32 = arith.constant 0 : i32
    %c0_i32_0 = arith.constant 0 : i32
    return %arg0, %c0_i32 : i32, i32
  }
}

</mosaic_0001>

<llo_original>
// kernel: mlp_forward.1
$region0: #{mlp_forward.1}
  #allocation0 [shape = 'u32[]', space=smem, size = 0x4, offset = 0x4, fixed_abs, tag = 'smem constant byte address 0x4 - core index']
  #allocation1 [shape = 'u32[144,128]{1,0:T(1,128)}', space=vmem, size = 0x12000, scoped, tag = 'internal scratch']
  %s0 = inlined_call_operand.vmem [shape: f32[128,784], index: 0, kind: input, shape index: {}]
  %s1 = inlined_call_operand.hbm [shape: bf16[784,512], index: 1, kind: input, shape index: {}]
  %s2 = inlined_call_operand.vmem [shape: f32[1,512], index: 2, kind: input, shape index: {}]
  %s3 = inlined_call_operand.vmem [shape: bf16[512,256], index: 3, kind: input, shape index: {}]
  %s4 = inlined_call_operand.vmem [shape: f32[1,256], index: 4, kind: input, shape index: {}]
  %s5 = inlined_call_operand.vmem [shape: bf16[256,128], index: 5, kind: input, shape index: {}]
  %s6 = inlined_call_operand.vmem [shape: f32[1,128], index: 6, kind: input, shape index: {}]
  %s7 = inlined_call_operand.vmem [shape: bf16[128,128], index: 7, kind: output, shape index: {}]
  %s8 = sld [smem:[#allocation0]]
  $region42: #{mlp_forward.1} parent=0
    _
  %s10 = ssub.s32 1, %s8
  %s11 = scalar_select 0, %s10, %s8
  $region1: #{mlp_forward.1} parent=0
    #allocation2 [shape = 'u8[802816]{0}', space=vmem, size = 0xc4000, scoped, tag = 'input window, operand 1, single buffered']
    #allocation3 [shape = 's32[1]{0}', space=sflag, size = 0x4, scoped, tag = 'scoped memory for mlp_forward.1']
    %12 = vsyncpa [#allocation3], 0
    // Predicated region
    $region2: #{mlp_forward.1} parent=1 // pred_check
      _
    $region3: #{mlp_forward.1} parent=1 // pred_check_branch
      %14 = sbr.rel (0) target = $region5
    $region4: #{mlp_forward.1} parent=1 // pred_region
      _
    $region5: #{mlp_forward.1} parent=1 // pred_fallthru
      _
    // Predicated region
    $region6: #{mlp_forward.1} parent=1 // pred_check
      _
    $region7: #{mlp_forward.1} parent=1 // pred_check_branch
      %16 = sbr.rel (0) target = $region9
    $region8: #{mlp_forward.1} parent=1 // pred_region
      %s18 = ssub.s32 25088, 25088
      %19 = vsyncadd [#allocation3], %s18
      %s20 = sshll.u32 [#allocation2], 4
      %s21 = int_to_ptr.vmem [resolvable:$true] %s20
      %26 = dma.hbm_to_vmem [thread:$0]  %s1, 25088, %s21, [#allocation3], 256, 256, 16
    $region9: #{mlp_forward.1} parent=1 // pred_fallthru
      _
    // Predicated region
    $region10: #{mlp_forward.1} parent=1 // pred_check
      _
    $region11: #{mlp_forward.1} parent=1 // pred_check_branch
      %28 = sbr.rel (0) target = $region13
    $region12: #{mlp_forward.1} parent=1 // pred_region
      _
    $region13: #{mlp_forward.1} parent=1 // pred_fallthru
      _
    // Predicated region
    $region14: #{mlp_forward.1} parent=1 // pred_check
      _
    $region15: #{mlp_forward.1} parent=1 // pred_check_branch
      %30 = sbr.rel (0) target = $region17
    $region16: #{mlp_forward.1} parent=1 // pred_region
      _
    $region17: #{mlp_forward.1} parent=1 // pred_fallthru
      _
    // Predicated region
    $region18: #{mlp_forward.1} parent=1 // pred_check
      _
    $region19: #{mlp_forward.1} parent=1 // pred_check_branch
      %32 = sbr.rel (0) target = $region21
    $region20: #{mlp_forward.1} parent=1 // pred_region
      _
    $region21: #{mlp_forward.1} parent=1 // pred_fallthru
      _
    // Predicated region
    $region22: #{mlp_forward.1} parent=1 // pred_check
      _
    $region23: #{mlp_forward.1} parent=1 // pred_check_branch
      %34 = sbr.rel (0) target = $region25
    $region24: #{mlp_forward.1} parent=1 // pred_region
      _
    $region25: #{mlp_forward.1} parent=1 // pred_fallthru
      _
    // Predicated region
    $region26: #{mlp_forward.1} parent=1 // pred_check
      _
    $region27: #{mlp_forward.1} parent=1 // pred_check_branch
      %36 = sbr.rel (0) target = $region29
    $region28: #{mlp_forward.1} parent=1 // pred_region
      _
    $region29: #{mlp_forward.1} parent=1 // pred_fallthru
      _
    // Predicated region
    $region30: #{mlp_forward.1} parent=1 // pred_check
      _
    $region31: #{mlp_forward.1} parent=1 // pred_check_branch
      %38 = sbr.rel (0) target = $region33
    $region32: #{mlp_forward.1} parent=1 // pred_region
      %39 = dma.done [#allocation3], 25088
    $region33: #{mlp_forward.1} parent=1 // pred_fallthru
      _
    %v41 = vld [vmem:[%s0] sm:$0xff]
    %v42 = vld [vmem:[%s0 + $0x8] sm:$0xff]
    %v43 = vld [vmem:[%s0 + $0x10] sm:$0xff]
    %v44 = vld [vmem:[%s0 + $0x18] sm:$0xff]
    %v45 = vld [vmem:[%s0 + $0x20] sm:$0xff]
    %v46 = vld [vmem:[%s0 + $0x28] sm:$0xff]
    %v47 = vld [vmem:[%s0 + $0x30] sm:$0xff]
    %v48 = vld [vmem:[%s0 + $0x38] sm:$0xff]
    %v49 = vld [vmem:[%s0 + $0x40] sm:$0xff]
    %v50 = vld [vmem:[%s0 + $0x48] sm:$0xff]
    %v51 = vld [vmem:[%s0 + $0x50] sm:$0xff]
    %v52 = vld [vmem:[%s0 + $0x58] sm:$0xff]
    %v53 = vld [vmem:[%s0 + $0x60] sm:$0xff]
    %v54 = vld [vmem:[%s0 + $0x68] sm:$0xff]
    %v55 = vld [vmem:[%s0 + $0x70] sm:$0xff]
    %v56 = vld [vmem:[%s0 + $0x78] sm:$0xff]
    %v57 = vld [vmem:[%s0 + $0x80] sm:$0xff]
    %v58 = vld [vmem:[%s0 + $0x88] sm:$0xff]
    %v59 = vld [vmem:[%s0 + $0x90] sm:$0xff]
    %v60 = vld [vmem:[%s0 + $0x98] sm:$0xff]
    %v61 = vld [vmem:[%s0 + $0xa0] sm:$0xff]
    %v62 = vld [vmem:[%s0 + $0xa8] sm:$0xff]
    %v63 = vld [vmem:[%s0 + $0xb0] sm:$0xff]
    %v64 = vld [vmem:[%s0 + $0xb8] sm:$0xff]
    %v65 = vld [vmem:[%s0 + $0xc0] sm:$0xff]
    %v66 = vld [vmem:[%s0 + $0xc8] sm:$0xff]
    %v67 = vld [vmem:[%s0 + $0xd0] sm:$0xff]
    %v68 = vld [vmem:[%s0 + $0xd8] sm:$0xff]
    %v69 = vld [vmem:[%s0 + $0xe0] sm:$0xff]
    %v70 = vld [vmem:[%s0 + $0xe8] sm:$0xff]
    %v71 = vld [vmem:[%s0 + $0xf0] sm:$0xff]
    %v72 = vld [vmem:[%s0 + $0xf8] sm:$0xff]
    %v73 = vld [vmem:[%s0 + $0x100] sm:$0xff]
    %v74 = vld [vmem:[%s0 + $0x108] sm:$0xff]
    %v75 = vld [vmem:[%s0 + $0x110] sm:$0xff]
    %v76 = vld [vmem:[%s0 + $0x118] sm:$0xff]
    %v77 = vld [vmem:[%s0 + $0x120] sm:$0xff]
    %v78 = vld [vmem:[%s0 + $0x128] sm:$0xff]
    %v79 = vld [vmem:[%s0 + $0x130] sm:$0xff]
    %v80 = vld [vmem:[%s0 + $0x138] sm:$0xff]
    %v81 = vld [vmem:[%s0 + $0x140] sm:$0xff]
    %v82 = vld [vmem:[%s0 + $0x148] sm:$0xff]
    %v83 = vld [vmem:[%s0 + $0x150] sm:$0xff]
    %v84 = vld [vmem:[%s0 + $0x158] sm:$0xff]
    %v85 = vld [vmem:[%s0 + $0x160] sm:$0xff]
    %v86 = vld [vmem:[%s0 + $0x168] sm:$0xff]
    %v87 = vld [vmem:[%s0 + $0x170] sm:$0xff]
    %v88 = vld [vmem:[%s0 + $0x178] sm:$0xff]
    %v89 = vld [vmem:[%s0 + $0x180] sm:$0xff]
    %v90 = vld [vmem:[%s0 + $0x188] sm:$0xff]
    %v91 = vld [vmem:[%s0 + $0x190] sm:$0xff]
    %v92 = vld [vmem:[%s0 + $0x198] sm:$0xff]
    %v93 = vld [vmem:[%s0 + $0x1a0] sm:$0xff]
    %v94 = vld [vmem:[%s0 + $0x1a8] sm:$0xff]
    %v95 = vld [vmem:[%s0 + $0x1b0] sm:$0xff]
    %v96 = vld [vmem:[%s0 + $0x1b8] sm:$0xff]
    %v97 = vld [vmem:[%s0 + $0x1c0] sm:$0xff]
    %v98 = vld [vmem:[%s0 + $0x1c8] sm:$0xff]
    %v99 = vld [vmem:[%s0 + $0x1d0] sm:$0xff]
    %v100 = vld [vmem:[%s0 + $0x1d8] sm:$0xff]
    %v101 = vld [vmem:[%s0 + $0x1e0] sm:$0xff]
    %v102 = vld [vmem:[%s0 + $0x1e8] sm:$0xff]
    %v103 = vld [vmem:[%s0 + $0x1f0] sm:$0xff]
    %v104 = vld [vmem:[%s0 + $0x1f8] sm:$0xff]
    %v105 = vld [vmem:[%s0 + $0x200] sm:$0xff]
    %v106 = vld [vmem:[%s0 + $0x208] sm:$0xff]
    %v107 = vld [vmem:[%s0 + $0x210] sm:$0xff]
    %v108 = vld [vmem:[%s0 + $0x218] sm:$0xff]
    %v109 = vld [vmem:[%s0 + $0x220] sm:$0xff]
    %v110 = vld [vmem:[%s0 + $0x228] sm:$0xff]
    %v111 = vld [vmem:[%s0 + $0x230] sm:$0xff]
    %v112 = vld [vmem:[%s0 + $0x238] sm:$0xff]
    %v113 = vld [vmem:[%s0 + $0x240] sm:$0xff]
    %v114 = vld [vmem:[%s0 + $0x248] sm:$0xff]
    %v115 = vld [vmem:[%s0 + $0x250] sm:$0xff]
    %v116 = vld [vmem:[%s0 + $0x258] sm:$0xff]
    %v117 = vld [vmem:[%s0 + $0x260] sm:$0xff]
    %v118 = vld [vmem:[%s0 + $0x268] sm:$0xff]
    %v119 = vld [vmem:[%s0 + $0x270] sm:$0xff]
    %v120 = vld [vmem:[%s0 + $0x278] sm:$0xff]
    %v121 = vld [vmem:[%s0 + $0x280] sm:$0xff]
    %v122 = vld [vmem:[%s0 + $0x288] sm:$0xff]
    %v123 = vld [vmem:[%s0 + $0x290] sm:$0xff]
    %v124 = vld [vmem:[%s0 + $0x298] sm:$0xff]
    %v125 = vld [vmem:[%s0 + $0x2a0] sm:$0xff]
    %v126 = vld [vmem:[%s0 + $0x2a8] sm:$0xff]
    %v127 = vld [vmem:[%s0 + $0x2b0] sm:$0xff]
    %v128 = vld [vmem:[%s0 + $0x2b8] sm:$0xff]
    %v129 = vld [vmem:[%s0 + $0x2c0] sm:$0xff]
    %v130 = vld [vmem:[%s0 + $0x2c8] sm:$0xff]
    %v131 = vld [vmem:[%s0 + $0x2d0] sm:$0xff]
    %v132 = vld [vmem:[%s0 + $0x2d8] sm:$0xff]
    %v133 = vld [vmem:[%s0 + $0x2e0] sm:$0xff]
    %v134 = vld [vmem:[%s0 + $0x2e8] sm:$0xff]
    %v135 = vld [vmem:[%s0 + $0x2f0] sm:$0xff]
    %v136 = vld [vmem:[%s0 + $0x2f8] sm:$0xff]
    %v137 = vld [vmem:[%s0 + $0x300] sm:$0xff]
    %v138 = vld [vmem:[%s0 + $0x308] sm:$0xff]
    %v139 = vld [vmem:[%s0 + $0x310] sm:$0xff]
    %v140 = vld [vmem:[%s0 + $0x318] sm:$0xff]
    %v141 = vld [vmem:[%s0 + $0x320] sm:$0xff]
    %v142 = vld [vmem:[%s0 + $0x328] sm:$0xff]
    %v143 = vld [vmem:[%s0 + $0x330] sm:$0xff]
    %v144 = vld [vmem:[%s0 + $0x338] sm:$0xff]
    %v145 = vld [vmem:[%s0 + $0x340] sm:$0xff]
    %v146 = vld [vmem:[%s0 + $0x348] sm:$0xff]
    %v147 = vld [vmem:[%s0 + $0x350] sm:$0xff]
    %v148 = vld [vmem:[%s0 + $0x358] sm:$0xff]
    %v149 = vld [vmem:[%s0 + $0x360] sm:$0xff]
    %v150 = vld [vmem:[%s0 + $0x368] sm:$0xff]
    %v151 = vld [vmem:[%s0 + $0x370] sm:$0xff]
    %v152 = vld [vmem:[%s0 + $0x378] sm:$0xff]
    %v153 = vpack.c.bf16 %v48, %v41
    %v154 = vpack.c.bf16 %v49, %v42
    %v155 = vpack.c.bf16 %v50, %v43
    %v156 = vpack.c.bf16 %v51, %v44
    %v157 = vpack.c.bf16 %v52, %v45
    %v158 = vpack.c.bf16 %v53, %v46
    %v159 = vpack.c.bf16 %v54, %v47
    %v160 = vpack.c.bf16 %v62, %v55
    %v161 = vpack.c.bf16 %v63, %v56
    %v162 = vpack.c.bf16 %v64, %v57
    %v163 = vpack.c.bf16 %v65, %v58
    %v164 = vpack.c.bf16 %v66, %v59
    %v165 = vpack.c.bf16 %v67, %v60
    %v166 = vpack.c.bf16 %v68, %v61
    %v167 = vpack.c.bf16 %v76, %v69
    %v168 = vpack.c.bf16 %v77, %v70
    %v169 = vpack.c.bf16 %v78, %v71
    %v170 = vpack.c.bf16 %v79, %v72
    %v171 = vpack.c.bf16 %v80, %v73
    %v172 = vpack.c.bf16 %v81, %v74
    %v173 = vpack.c.bf16 %v82, %v75
    %v174 = vpack.c.bf16 %v90, %v83
    %v175 = vpack.c.bf16 %v91, %v84
    %v176 = vpack.c.bf16 %v92, %v85
    %v177 = vpack.c.bf16 %v93, %v86
    %v178 = vpack.c.bf16 %v94, %v87
    %v179 = vpack.c.bf16 %v95, %v88
    %v180 = vpack.c.bf16 %v96, %v89
    %v181 = vpack.c.bf16 %v104, %v97
    %v182 = vpack.c.bf16 %v105, %v98
    %v183 = vpack.c.bf16 %v106, %v99
    %v184 = vpack.c.bf16 %v107, %v100
    %v185 = vpack.c.bf16 %v108, %v101
    %v186 = vpack.c.bf16 %v109, %v102
    %v187 = vpack.c.bf16 %v110, %v103
    %v188 = vpack.c.bf16 %v118, %v111
    %v189 = vpack.c.bf16 %v119, %v112
    %v190 = vpack.c.bf16 %v120, %v113
    %v191 = vpack.c.bf16 %v121, %v114
    %v192 = vpack.c.bf16 %v122, %v115
    %v193 = vpack.c.bf16 %v123, %v116
    %v194 = vpack.c.bf16 %v124, %v117
    %v195 = vpack.c.bf16 %v132, %v125
    %v196 = vpack.c.bf16 %v133, %v126
    %v197 = vpack.c.bf16 %v134, %v127
    %v198 = vpack.c.bf16 %v135, %v128
    %v199 = vpack.c.bf16 %v136, %v129
    %v200 = vpack.c.bf16 %v137, %v130
    %v201 = vpack.c.bf16 %v138, %v131
    %v202 = vpack.c.bf16 %v146, %v139
    %v203 = vpack.c.bf16 %v147, %v140
    %v204 = vpack.c.bf16 %v148, %v141
    %v205 = vpack.c.bf16 %v149, %v142
    %v206 = vpack.c.bf16 %v150, %v143
    %v207 = vpack.c.bf16 %v151, %v144
    %v208 = vpack.c.bf16 %v152, %v145
    %v209 = vld [vmem:[#allocation2] sm:$0xff]
    %v210 = vld [vmem:[#allocation2 + $0x8] sm:$0xff]
    %v211 = vld [vmem:[#allocation2 + $0x10] sm:$0xff]
    %v212 = vld [vmem:[#allocation2 + $0x18] sm:$0xff]
    %v213 = vld [vmem:[#allocation2 + $0x20] sm:$0xff]
    %v214 = vld [vmem:[#allocation2 + $0x28] sm:$0xff]
    %v215 = vld [vmem:[#allocation2 + $0x30] sm:$0xff]
    %v216 = vld [vmem:[#allocation2 + $0x38] sm:$0xff]
    %v217 = vld [vmem:[#allocation2 + $0x40] sm:$0xff]
    %v218 = vld [vmem:[#allocation2 + $0x48] sm:$0xff]
    %v219 = vld [vmem:[#allocation2 + $0x50] sm:$0xff]
    %v220 = vld [vmem:[#allocation2 + $0x58] sm:$0xff]
    %v221 = vld [vmem:[#allocation2 + $0x60] sm:$0xff]
    %v222 = vld [vmem:[#allocation2 + $0x68] sm:$0xff]
    %v223 = vld [vmem:[#allocation2 + $0x70] sm:$0xff]
    %v224 = vld [vmem:[#allocation2 + $0x78] sm:$0xff]
    %v225 = vld [vmem:[#allocation2 + $0x80] sm:$0xff]
    %v226 = vld [vmem:[#allocation2 + $0x88] sm:$0xff]
    %v227 = vld [vmem:[#allocation2 + $0x90] sm:$0xff]
    %v228 = vld [vmem:[#allocation2 + $0x98] sm:$0xff]
    %v229 = vld [vmem:[#allocation2 + $0xa0] sm:$0xff]
    %v230 = vld [vmem:[#allocation2 + $0xa8] sm:$0xff]
    %v231 = vld [vmem:[#allocation2 + $0xb0] sm:$0xff]
    %v232 = vld [vmem:[#allocation2 + $0xb8] sm:$0xff]
    %v233 = vld [vmem:[#allocation2 + $0xc0] sm:$0xff]
    %v234 = vld [vmem:[#allocation2 + $0xc8] sm:$0xff]
    %v235 = vld [vmem:[#allocation2 + $0xd0] sm:$0xff]
    %v236 = vld [vmem:[#allocation2 + $0xd8] sm:$0xff]
    %v237 = vld [vmem:[#allocation2 + $0xe0] sm:$0xff]
    %v238 = vld [vmem:[#allocation2 + $0xe8] sm:$0xff]
    %v239 = vld [vmem:[#allocation2 + $0xf0] sm:$0xff]
    %v240 = vld [vmem:[#allocation2 + $0xf8] sm:$0xff]
    %v241 = vld [vmem:[#allocation2 + $0x100] sm:$0xff]
    %v242 = vld [vmem:[#allocation2 + $0x108] sm:$0xff]
    %v243 = vld [vmem:[#allocation2 + $0x110] sm:$0xff]
    %v244 = vld [vmem:[#allocation2 + $0x118] sm:$0xff]
    %v245 = vld [vmem:[#allocation2 + $0x120] sm:$0xff]
    %v246 = vld [vmem:[#allocation2 + $0x128] sm:$0xff]
    %v247 = vld [vmem:[#allocation2 + $0x130] sm:$0xff]
    %v248 = vld [vmem:[#allocation2 + $0x138] sm:$0xff]
    %v249 = vld [vmem:[#allocation2 + $0x140] sm:$0xff]
    %v250 = vld [vmem:[#allocation2 + $0x148] sm:$0xff]
    %v251 = vld [vmem:[#allocation2 + $0x150] sm:$0xff]
    %v252 = vld [vmem:[#allocation2 + $0x158] sm:$0xff]
    %v253 = vld [vmem:[#allocation2 + $0x160] sm:$0xff]
    %v254 = vld [vmem:[#allocation2 + $0x168] sm:$0xff]
    %v255 = vld [vmem:[#allocation2 + $0x170] sm:$0xff]
    %v256 = vld [vmem:[#allocation2 + $0x178] sm:$0xff]
    %v257 = vld [vmem:[#allocation2 + $0x180] sm:$0xff]
    %v258 = vld [vmem:[#allocation2 + $0x188] sm:$0xff]
    %v259 = vld [vmem:[#allocation2 + $0x190] sm:$0xff]
    %v260 = vld [vmem:[#allocation2 + $0x198] sm:$0xff]
    %v261 = vld [vmem:[#allocation2 + $0x1a0] sm:$0xff]
    %v262 = vld [vmem:[#allocation2 + $0x1a8] sm:$0xff]
    %v263 = vld [vmem:[#allocation2 + $0x1b0] sm:$0xff]
    %v264 = vld [vmem:[#allocation2 + $0x1b8] sm:$0xff]
    %v265 = vld [vmem:[#allocation2 + $0x1c0] sm:$0xff]
    %v266 = vld [vmem:[#allocation2 + $0x1c8] sm:$0xff]
    %v267 = vld [vmem:[#allocation2 + $0x1d0] sm:$0xff]
    %v268 = vld [vmem:[#allocation2 + $0x1d8] sm:$0xff]
    %v269 = vld [vmem:[#allocation2 + $0x1e0] sm:$0xff]
    %v270 = vld [vmem:[#allocation2 + $0x1e8] sm:$0xff]
    %v271 = vld [vmem:[#allocation2 + $0x1f0] sm:$0xff]
    %v272 = vld [vmem:[#allocation2 + $0x1f8] sm:$0xff]
    %v273 = vld [vmem:[#allocation2 + $0x200] sm:$0xff]
    %v274 = vld [vmem:[#allocation2 + $0x208] sm:$0xff]
    %v275 = vld [vmem:[#allocation2 + $0x210] sm:$0xff]
    %v276 = vld [vmem:[#allocation2 + $0x218] sm:$0xff]
    %v277 = vld [vmem:[#allocation2 + $0x220] sm:$0xff]
    %v278 = vld [vmem:[#allocation2 + $0x228] sm:$0xff]
    %v279 = vld [vmem:[#allocation2 + $0x230] sm:$0xff]
    %v280 = vld [vmem:[#allocation2 + $0x238] sm:$0xff]
    %v281 = vld [vmem:[#allocation2 + $0x240] sm:$0xff]
    %v282 = vld [vmem:[#allocation2 + $0x248] sm:$0xff]
    %v283 = vld [vmem:[#allocation2 + $0x250] sm:$0xff]
    %v284 = vld [vmem:[#allocation2 + $0x258] sm:$0xff]
    %v285 = vld [vmem:[#allocation2 + $0x260] sm:$0xff]
    %v286 = vld [vmem:[#allocation2 + $0x268] sm:$0xff]
    %v287 = vld [vmem:[#allocation2 + $0x270] sm:$0xff]
    %v288 = vld [vmem:[#allocation2 + $0x278] sm:$0xff]
    %v289 = vld [vmem:[#allocation2 + $0x280] sm:$0xff]
    %v290 = vld [vmem:[#allocation2 + $0x288] sm:$0xff]
    %v291 = vld [vmem:[#allocation2 + $0x290] sm:$0xff]
    %v292 = vld [vmem:[#allocation2 + $0x298] sm:$0xff]
    %v293 = vld [vmem:[#allocation2 + $0x2a0] sm:$0xff]
    %v294 = vld [vmem:[#allocation2 + $0x2a8] sm:$0xff]
    %v295 = vld [vmem:[#allocation2 + $0x2b0] sm:$0xff]
    %v296 = vld [vmem:[#allocation2 + $0x2b8] sm:$0xff]
    %v297 = vld [vmem:[#allocation2 + $0x2c0] sm:$0xff]
    %v298 = vld [vmem:[#allocation2 + $0x2c8] sm:$0xff]
    %v299 = vld [vmem:[#allocation2 + $0x2d0] sm:$0xff]
    %v300 = vld [vmem:[#allocation2 + $0x2d8] sm:$0xff]
    %v301 = vld [vmem:[#allocation2 + $0x2e0] sm:$0xff]
    %v302 = vld [vmem:[#allocation2 + $0x2e8] sm:$0xff]
    %v303 = vld [vmem:[#allocation2 + $0x2f0] sm:$0xff]
    %v304 = vld [vmem:[#allocation2 + $0x2f8] sm:$0xff]
    %v305 = vld [vmem:[#allocation2 + $0x300] sm:$0xff]
    %v306 = vld [vmem:[#allocation2 + $0x308] sm:$0xff]
    %v307 = vld [vmem:[#allocation2 + $0x310] sm:$0xff]
    %v308 = vld [vmem:[#allocation2 + $0x318] sm:$0xff]
    %v309 = vld [vmem:[#allocation2 + $0x320] sm:$0xff]
    %v310 = vld [vmem:[#allocation2 + $0x328] sm:$0xff]
    %v311 = vld [vmem:[#allocation2 + $0x330] sm:$0xff]
    %v312 = vld [vmem:[#allocation2 + $0x338] sm:$0xff]
    %v313 = vld [vmem:[#allocation2 + $0x340] sm:$0xff]
    %v314 = vld [vmem:[#allocation2 + $0x348] sm:$0xff]
    %v315 = vld [vmem:[#allocation2 + $0x350] sm:$0xff]
    %v316 = vld [vmem:[#allocation2 + $0x358] sm:$0xff]
    %v317 = vld [vmem:[#allocation2 + $0x360] sm:$0xff]
    %v318 = vld [vmem:[#allocation2 + $0x368] sm:$0xff]
    %v319 = vld [vmem:[#allocation2 + $0x370] sm:$0xff]
    %v320 = vld [vmem:[#allocation2 + $0x378] sm:$0xff]
    %v321 = vld [vmem:[#allocation2 + $0x380] sm:$0xff]
    %v322 = vld [vmem:[#allocation2 + $0x388] sm:$0xff]
    %v323 = vld [vmem:[#allocation2 + $0x390] sm:$0xff]
    %v324 = vld [vmem:[#allocation2 + $0x398] sm:$0xff]
    %v325 = vld [vmem:[#allocation2 + $0x3a0] sm:$0xff]
    %v326 = vld [vmem:[#allocation2 + $0x3a8] sm:$0xff]
    %v327 = vld [vmem:[#allocation2 + $0x3b0] sm:$0xff]
    %v328 = vld [vmem:[#allocation2 + $0x3b8] sm:$0xff]
    %v329 = vld [vmem:[#allocation2 + $0x3c0] sm:$0xff]
    %v330 = vld [vmem:[#allocation2 + $0x3c8] sm:$0xff]
    %v331 = vld [vmem:[#allocation2 + $0x3d0] sm:$0xff]
    %v332 = vld [vmem:[#allocation2 + $0x3d8] sm:$0xff]
    %v333 = vld [vmem:[#allocation2 + $0x3e0] sm:$0xff]
    %v334 = vld [vmem:[#allocation2 + $0x3e8] sm:$0xff]
    %v335 = vld [vmem:[#allocation2 + $0x3f0] sm:$0xff]
    %v336 = vld [vmem:[#allocation2 + $0x3f8] sm:$0xff]
    %v337 = vld [vmem:[#allocation2 + $0x400] sm:$0xff]
    %v338 = vld [vmem:[#allocation2 + $0x408] sm:$0xff]
    %v339 = vld [vmem:[#allocation2 + $0x410] sm:$0xff]
    %v340 = vld [vmem:[#allocation2 + $0x418] sm:$0xff]
    %v341 = vld [vmem:[#allocation2 + $0x420] sm:$0xff]
    %v342 = vld [vmem:[#allocation2 + $0x428] sm:$0xff]
    %v343 = vld [vmem:[#allocation2 + $0x430] sm:$0xff]
    %v344 = vld [vmem:[#allocation2 + $0x438] sm:$0xff]
    %v345 = vld [vmem:[#allocation2 + $0x440] sm:$0xff]
    %v346 = vld [vmem:[#allocation2 + $0x448] sm:$0xff]
    %v347 = vld [vmem:[#allocation2 + $0x450] sm:$0xff]
    %v348 = vld [vmem:[#allocation2 + $0x458] sm:$0xff]
    %v349 = vld [vmem:[#allocation2 + $0x460] sm:$0xff]
    %v350 = vld [vmem:[#allocation2 + $0x468] sm:$0xff]
    %v351 = vld [vmem:[#allocation2 + $0x470] sm:$0xff]
    %v352 = vld [vmem:[#allocation2 + $0x478] sm:$0xff]
    %v353 = vld [vmem:[#allocation2 + $0x480] sm:$0xff]
    %v354 = vld [vmem:[#allocation2 + $0x488] sm:$0xff]
    %v355 = vld [vmem:[#allocation2 + $0x490] sm:$0xff]
    %v356 = vld [vmem:[#allocation2 + $0x498] sm:$0xff]
    %v357 = vld [vmem:[#allocation2 + $0x4a0] sm:$0xff]
    %v358 = vld [vmem:[#allocation2 + $0x4a8] sm:$0xff]
    %v359 = vld [vmem:[#allocation2 + $0x4b0] sm:$0xff]
    %v360 = vld [vmem:[#allocation2 + $0x4b8] sm:$0xff]
    %v361 = vld [vmem:[#allocation2 + $0x4c0] sm:$0xff]
    %v362 = vld [vmem:[#allocation2 + $0x4c8] sm:$0xff]
    %v363 = vld [vmem:[#allocation2 + $0x4d0] sm:$0xff]
    %v364 = vld [vmem:[#allocation2 + $0x4d8] sm:$0xff]
    %v365 = vld [vmem:[#allocation2 + $0x4e0] sm:$0xff]
    %v366 = vld [vmem:[#allocation2 + $0x4e8] sm:$0xff]
    %v367 = vld [vmem:[#allocation2 + $0x4f0] sm:$0xff]
    %v368 = vld [vmem:[#allocation2 + $0x4f8] sm:$0xff]
    %v369 = vld [vmem:[#allocation2 + $0x500] sm:$0xff]
    %v370 = vld [vmem:[#allocation2 + $0x508] sm:$0xff]
    %v371 = vld [vmem:[#allocation2 + $0x510] sm:$0xff]
    %v372 = vld [vmem:[#allocation2 + $0x518] sm:$0xff]
    %v373 = vld [vmem:[#allocation2 + $0x520] sm:$0xff]
    %v374 = vld [vmem:[#allocation2 + $0x528] sm:$0xff]
    %v375 = vld [vmem:[#allocation2 + $0x530] sm:$0xff]
    %v376 = vld [vmem:[#allocation2 + $0x538] sm:$0xff]
    %v377 = vld [vmem:[#allocation2 + $0x540] sm:$0xff]
    %v378 = vld [vmem:[#allocation2 + $0x548] sm:$0xff]
    %v379 = vld [vmem:[#allocation2 + $0x550] sm:$0xff]
    %v380 = vld [vmem:[#allocation2 + $0x558] sm:$0xff]
    %v381 = vld [vmem:[#allocation2 + $0x560] sm:$0xff]
    %v382 = vld [vmem:[#allocation2 + $0x568] sm:$0xff]
    %v383 = vld [vmem:[#allocation2 + $0x570] sm:$0xff]
    %v384 = vld [vmem:[#allocation2 + $0x578] sm:$0xff]
    %v385 = vld [vmem:[#allocation2 + $0x580] sm:$0xff]
    %v386 = vld [vmem:[#allocation2 + $0x588] sm:$0xff]
    %v387 = vld [vmem:[#allocation2 + $0x590] sm:$0xff]
    %v388 = vld [vmem:[#allocation2 + $0x598] sm:$0xff]
    %v389 = vld [vmem:[#allocation2 + $0x5a0] sm:$0xff]
    %v390 = vld [vmem:[#allocation2 + $0x5a8] sm:$0xff]
    %v391 = vld [vmem:[#allocation2 + $0x5b0] sm:$0xff]
    %v392 = vld [vmem:[#allocation2 + $0x5b8] sm:$0xff]
    %v393 = vld [vmem:[#allocation2 + $0x5c0] sm:$0xff]
    %v394 = vld [vmem:[#allocation2 + $0x5c8] sm:$0xff]
    %v395 = vld [vmem:[#allocation2 + $0x5d0] sm:$0xff]
    %v396 = vld [vmem:[#allocation2 + $0x5d8] sm:$0xff]
    %v397 = vld [vmem:[#allocation2 + $0x5e0] sm:$0xff]
    %v398 = vld [vmem:[#allocation2 + $0x5e8] sm:$0xff]
    %v399 = vld [vmem:[#allocation2 + $0x5f0] sm:$0xff]
    %v400 = vld [vmem:[#allocation2 + $0x5f8] sm:$0xff]
    %v401 = vld [vmem:[#allocation2 + $0x600] sm:$0xff]
    %v402 = vld [vmem:[#allocation2 + $0x608] sm:$0xff]
    %v403 = vld [vmem:[#allocation2 + $0x610] sm:$0xff]
    %v404 = vld [vmem:[#allocation2 + $0x618] sm:$0xff]
    %v405 = vld [vmem:[%s2] sm:$0xf]
    %v407 = vlaneseq
    %v408 = vshrl.u32 %v407, 7
    %v409 = vsub.s32 0, %v408
    %v410 = vrot.slane %v405, %v409
    %v411 = vlaneseq
    %v412 = vshrl.u32 %v411, 7
    %v413 = vsub.s32 1, %v412
    %v414 = vrot.slane %v405, %v413
    %v415 = vlaneseq
    %v416 = vshrl.u32 %v415, 7
    %v417 = vsub.s32 2, %v416
    %v418 = vrot.slane %v405, %v417
    %v419 = vlaneseq
    %v420 = vshrl.u32 %v419, 7
    %v421 = vsub.s32 3, %v420
    %v422 = vrot.slane %v405, %v421
    %v623 = vunpack.c.l.b16 %v209
    %v624 = vunpack.c.h.b16 %v209
    %v625 = vunpack.c.l.b16 %v210
    %v626 = vunpack.c.h.b16 %v210
    %v627 = vunpack.c.l.b16 %v211
    %v628 = vunpack.c.h.b16 %v211
    %v629 = vunpack.c.l.b16 %v212
    %v630 = vunpack.c.h.b16 %v212
    %v631 = vunpack.c.l.b16 %v213
    %v632 = vunpack.c.h.b16 %v213
    %v633 = vunpack.c.l.b16 %v214
    %v634 = vunpack.c.h.b16 %v214
    %v635 = vunpack.c.l.b16 %v215
    %v636 = vunpack.c.h.b16 %v215
    %v637 = vunpack.c.l.b16 %v216
    %v638 = vunpack.c.h.b16 %v216
    %v639 = vunpack.c.l.b16 %v217
    %v640 = vunpack.c.h.b16 %v217
    %v641 = vunpack.c.l.b16 %v218
    %v642 = vunpack.c.h.b16 %v218
    %v643 = vunpack.c.l.b16 %v219
    %v644 = vunpack.c.h.b16 %v219
    %v645 = vunpack.c.l.b16 %v220
    %v646 = vunpack.c.h.b16 %v220
    %v647 = vunpack.c.l.b16 %v221
    %v648 = vunpack.c.h.b16 %v221
    %v649 = vunpack.c.l.b16 %v222
    %v650 = vunpack.c.h.b16 %v222
    %v651 = vunpack.c.l.b16 %v223
    %v652 = vunpack.c.h.b16 %v223
    %v653 = vunpack.c.l.b16 %v224
    %v654 = vunpack.c.h.b16 %v224
    %v655 = vunpack.c.l.b16 %v225
    %v656 = vunpack.c.h.b16 %v225
    %v657 = vunpack.c.l.b16 %v226
    %v658 = vunpack.c.h.b16 %v226
    %v659 = vunpack.c.l.b16 %v227
    %v660 = vunpack.c.h.b16 %v227
    %v661 = vunpack.c.l.b16 %v228
    %v662 = vunpack.c.h.b16 %v228
    %v663 = vunpack.c.l.b16 %v229
    %v664 = vunpack.c.h.b16 %v229
    %v665 = vunpack.c.l.b16 %v230
    %v666 = vunpack.c.h.b16 %v230
    %v667 = vunpack.c.l.b16 %v231
    %v668 = vunpack.c.h.b16 %v231
    %v669 = vunpack.c.l.b16 %v232
    %v670 = vunpack.c.h.b16 %v232
    %v671 = vunpack.c.l.b16 %v233
    %v672 = vunpack.c.h.b16 %v233
    %v673 = vunpack.c.l.b16 %v234
    %v674 = vunpack.c.h.b16 %v234
    %v675 = vunpack.c.l.b16 %v235
    %v676 = vunpack.c.h.b16 %v235
    %v677 = vunpack.c.l.b16 %v236
    %v678 = vunpack.c.h.b16 %v236
    %v679 = vunpack.c.l.b16 %v237
    %v680 = vunpack.c.h.b16 %v237
    %v681 = vunpack.c.l.b16 %v238
    %v682 = vunpack.c.h.b16 %v238
    %v683 = vunpack.c.l.b16 %v239
    %v684 = vunpack.c.h.b16 %v239
    %v685 = vunpack.c.l.b16 %v240
    %v686 = vunpack.c.h.b16 %v240
    %v687 = vunpack.c.l.b16 %v241
    %v688 = vunpack.c.h.b16 %v241
    %v689 = vunpack.c.l.b16 %v242
    %v690 = vunpack.c.h.b16 %v242
    %v691 = vunpack.c.l.b16 %v243
    %v692 = vunpack.c.h.b16 %v243
    %v693 = vunpack.c.l.b16 %v244
    %v694 = vunpack.c.h.b16 %v244
    %v695 = vunpack.c.l.b16 %v245
    %v696 = vunpack.c.h.b16 %v245
    %v697 = vunpack.c.l.b16 %v246
    %v698 = vunpack.c.h.b16 %v246
    %v699 = vunpack.c.l.b16 %v247
    %v700 = vunpack.c.h.b16 %v247
    %v701 = vunpack.c.l.b16 %v248
    %v702 = vunpack.c.h.b16 %v248
    %v703 = vunpack.c.l.b16 %v249
    %v704 = vunpack.c.h.b16 %v249
    %v705 = vunpack.c.l.b16 %v250
    %v706 = vunpack.c.h.b16 %v250
    %v707 = vunpack.c.l.b16 %v251
    %v708 = vunpack.c.h.b16 %v251
    %v709 = vunpack.c.l.b16 %v252
    %v710 = vunpack.c.h.b16 %v252
    %v711 = vunpack.c.l.b16 %v253
    %v712 = vunpack.c.h.b16 %v253
    %v713 = vunpack.c.l.b16 %v254
    %v714 = vunpack.c.h.b16 %v254
    %v715 = vunpack.c.l.b16 %v255
    %v716 = vunpack.c.h.b16 %v255
    %v717 = vunpack.c.l.b16 %v256
    %v718 = vunpack.c.h.b16 %v256
    %v719 = vunpack.c.l.b16 %v257
    %v720 = vunpack.c.h.b16 %v257
    %v721 = vunpack.c.l.b16 %v258
    %v722 = vunpack.c.h.b16 %v258
    %v723 = vunpack.c.l.b16 %v259
    %v724 = vunpack.c.h.b16 %v259
    %v725 = vunpack.c.l.b16 %v260
    %v726 = vunpack.c.h.b16 %v260
    %v727 = vunpack.c.l.b16 %v261
    %v728 = vunpack.c.h.b16 %v261
    %v729 = vunpack.c.l.b16 %v262
    %v730 = vunpack.c.h.b16 %v262
    %v731 = vunpack.c.l.b16 %v263
    %v732 = vunpack.c.h.b16 %v263
    %v733 = vunpack.c.l.b16 %v264
    %v734 = vunpack.c.h.b16 %v264
    %v735 = vunpack.c.l.b16 %v265
    %v736 = vunpack.c.h.b16 %v265
    %v737 = vunpack.c.l.b16 %v266
    %v738 = vunpack.c.h.b16 %v266
    %v739 = vunpack.c.l.b16 %v267
    %v740 = vunpack.c.h.b16 %v267
    %v741 = vunpack.c.l.b16 %v268
    %v742 = vunpack.c.h.b16 %v268
    %v743 = vunpack.c.l.b16 %v269
    %v744 = vunpack.c.h.b16 %v269
    %v745 = vunpack.c.l.b16 %v270
    %v746 = vunpack.c.h.b16 %v270
    %v747 = vunpack.c.l.b16 %v271
    %v748 = vunpack.c.h.b16 %v271
    %v749 = vunpack.c.l.b16 %v272
    %v750 = vunpack.c.h.b16 %v272
    %v751 = vunpack.c.l.b16 %v273
    %v752 = vunpack.c.h.b16 %v273
    %v753 = vunpack.c.l.b16 %v274
    %v754 = vunpack.c.h.b16 %v274
    %v755 = vunpack.c.l.b16 %v275
    %v756 = vunpack.c.h.b16 %v275
    %v757 = vunpack.c.l.b16 %v276
    %v758 = vunpack.c.h.b16 %v276
    %v759 = vunpack.c.l.b16 %v277
    %v760 = vunpack.c.h.b16 %v277
    %v761 = vunpack.c.l.b16 %v278
    %v762 = vunpack.c.h.b16 %v278
    %v763 = vunpack.c.l.b16 %v279
    %v764 = vunpack.c.h.b16 %v279
    %v765 = vunpack.c.l.b16 %v280
    %v766 = vunpack.c.h.b16 %v280
    %v767 = vunpack.c.l.b16 %v281
    %v768 = vunpack.c.h.b16 %v281
    %v769 = vunpack.c.l.b16 %v282
    %v770 = vunpack.c.h.b16 %v282
    %v771 = vunpack.c.l.b16 %v283
    %v772 = vunpack.c.h.b16 %v283
    %v773 = vunpack.c.l.b16 %v284
    %v774 = vunpack.c.h.b16 %v284
    %v775 = vunpack.c.l.b16 %v285
    %v776 = vunpack.c.h.b16 %v285
    %v777 = vunpack.c.l.b16 %v286
    %v778 = vunpack.c.h.b16 %v286
    %v779 = vunpack.c.l.b16 %v287
    %v780 = vunpack.c.h.b16 %v287
    %v781 = vunpack.c.l.b16 %v288
    %v782 = vunpack.c.h.b16 %v288
    %v783 = vunpack.c.l.b16 %v289
    %v784 = vunpack.c.h.b16 %v289
    %v785 = vunpack.c.l.b16 %v290
    %v786 = vunpack.c.h.b16 %v290
    %v787 = vunpack.c.l.b16 %v291
    %v788 = vunpack.c.h.b16 %v291
    %v789 = vunpack.c.l.b16 %v292
    %v790 = vunpack.c.h.b16 %v292
    %v791 = vunpack.c.l.b16 %v293
    %v792 = vunpack.c.h.b16 %v293
    %v793 = vunpack.c.l.b16 %v294
    %v794 = vunpack.c.h.b16 %v294
    %v795 = vunpack.c.l.b16 %v295
    %v796 = vunpack.c.h.b16 %v295
    %v797 = vunpack.c.l.b16 %v296
    %v798 = vunpack.c.h.b16 %v296
    %v799 = vunpack.c.l.b16 %v297
    %v800 = vunpack.c.h.b16 %v297
    %v801 = vunpack.c.l.b16 %v298
    %v802 = vunpack.c.h.b16 %v298
    %v803 = vunpack.c.l.b16 %v299
    %v804 = vunpack.c.h.b16 %v299
    %v805 = vunpack.c.l.b16 %v300
    %v806 = vunpack.c.h.b16 %v300
    %v807 = vunpack.c.l.b16 %v301
    %v808 = vunpack.c.h.b16 %v301
    %v809 = vunpack.c.l.b16 %v302
    %v810 = vunpack.c.h.b16 %v302
    %v811 = vunpack.c.l.b16 %v303
    %v812 = vunpack.c.h.b16 %v303
    %v813 = vunpack.c.l.b16 %v304
    %v814 = vunpack.c.h.b16 %v304
    %v815 = vunpack.c.l.b16 %v305
    %v816 = vunpack.c.h.b16 %v305
    %v817 = vunpack.c.l.b16 %v306
    %v818 = vunpack.c.h.b16 %v306
    %v819 = vunpack.c.l.b16 %v307
    %v820 = vunpack.c.h.b16 %v307
    %v821 = vunpack.c.l.b16 %v308
    %v822 = vunpack.c.h.b16 %v308
    %v823 = vunpack.c.l.b16 %v309
    %v824 = vunpack.c.h.b16 %v309
    %v825 = vunpack.c.l.b16 %v310
    %v826 = vunpack.c.h.b16 %v310
    %v827 = vunpack.c.l.b16 %v311
    %v828 = vunpack.c.h.b16 %v311
    %v829 = vunpack.c.l.b16 %v312
    %v830 = vunpack.c.h.b16 %v312
    %v831 = vunpack.c.l.b16 %v313
    %v832 = vunpack.c.h.b16 %v313
    %v833 = vunpack.c.l.b16 %v314
    %v834 = vunpack.c.h.b16 %v314
    %v835 = vunpack.c.l.b16 %v315
    %v836 = vunpack.c.h.b16 %v315
    %v837 = vunpack.c.l.b16 %v316
    %v838 = vunpack.c.h.b16 %v316
    %v839 = vunpack.c.l.b16 %v317
    %v840 = vunpack.c.h.b16 %v317
    %v841 = vunpack.c.l.b16 %v318
    %v842 = vunpack.c.h.b16 %v318
    %v843 = vunpack.c.l.b16 %v319
    %v844 = vunpack.c.h.b16 %v319
    %v845 = vunpack.c.l.b16 %v320
    %v846 = vunpack.c.h.b16 %v320
    %v847 = vunpack.c.l.b16 %v321
    %v848 = vunpack.c.h.b16 %v321
    %v849 = vunpack.c.l.b16 %v322
    %v850 = vunpack.c.h.b16 %v322
    %v851 = vunpack.c.l.b16 %v323
    %v852 = vunpack.c.h.b16 %v323
    %v853 = vunpack.c.l.b16 %v324
    %v854 = vunpack.c.h.b16 %v324
    %v855 = vunpack.c.l.b16 %v325
    %v856 = vunpack.c.h.b16 %v325
    %v857 = vunpack.c.l.b16 %v326
    %v858 = vunpack.c.h.b16 %v326
    %v859 = vunpack.c.l.b16 %v327
    %v860 = vunpack.c.h.b16 %v327
    %v861 = vunpack.c.l.b16 %v328
    %v862 = vunpack.c.h.b16 %v328
    %v863 = vunpack.c.l.b16 %v329
    %v864 = vunpack.c.h.b16 %v329
    %v865 = vunpack.c.l.b16 %v330
    %v866 = vunpack.c.h.b16 %v330
    %v867 = vunpack.c.l.b16 %v331
    %v868 = vunpack.c.h.b16 %v331
    %v869 = vunpack.c.l.b16 %v332
    %v870 = vunpack.c.h.b16 %v332
    %v871 = vunpack.c.l.b16 %v333
    %v872 = vunpack.c.h.b16 %v333
    %v873 = vunpack.c.l.b16 %v334
    %v874 = vunpack.c.h.b16 %v334
    %v875 = vunpack.c.l.b16 %v335
    %v876 = vunpack.c.h.b16 %v335
    %v877 = vunpack.c.l.b16 %v336
    %v878 = vunpack.c.h.b16 %v336
    %v879 = vunpack.c.l.b16 %v337
    %v880 = vunpack.c.h.b16 %v337
    %v881 = vunpack.c.l.b16 %v338
    %v882 = vunpack.c.h.b16 %v338
    %v883 = vunpack.c.l.b16 %v339
    %v884 = vunpack.c.h.b16 %v339
    %v885 = vunpack.c.l.b16 %v340
    %v886 = vunpack.c.h.b16 %v340
    %v887 = vunpack.c.l.b16 %v341
    %v888 = vunpack.c.h.b16 %v341
    %v889 = vunpack.c.l.b16 %v342
    %v890 = vunpack.c.h.b16 %v342
    %v891 = vunpack.c.l.b16 %v343
    %v892 = vunpack.c.h.b16 %v343
    %v893 = vunpack.c.l.b16 %v344
    %v894 = vunpack.c.h.b16 %v344
    %v895 = vunpack.c.l.b16 %v345
    %v896 = vunpack.c.h.b16 %v345
    %v897 = vunpack.c.l.b16 %v346
    %v898 = vunpack.c.h.b16 %v346
    %v899 = vunpack.c.l.b16 %v347
    %v900 = vunpack.c.h.b16 %v347
    %v901 = vunpack.c.l.b16 %v348
    %v902 = vunpack.c.h.b16 %v348
    %v903 = vunpack.c.l.b16 %v349
    %v904 = vunpack.c.h.b16 %v349
    %v905 = vunpack.c.l.b16 %v350
    %v906 = vunpack.c.h.b16 %v350
    %v907 = vunpack.c.l.b16 %v351
    %v908 = vunpack.c.h.b16 %v351
    %v909 = vunpack.c.l.b16 %v352
    %v910 = vunpack.c.h.b16 %v352
    %v911 = vunpack.c.l.b16 %v353
    %v912 = vunpack.c.h.b16 %v353
    %v913 = vunpack.c.l.b16 %v354
    %v914 = vunpack.c.h.b16 %v354
    %v915 = vunpack.c.l.b16 %v355
    %v916 = vunpack.c.h.b16 %v355
    %v917 = vunpack.c.l.b16 %v356
    %v918 = vunpack.c.h.b16 %v356
    %v919 = vunpack.c.l.b16 %v357
    %v920 = vunpack.c.h.b16 %v357
    %v921 = vunpack.c.l.b16 %v358
    %v922 = vunpack.c.h.b16 %v358
    %v923 = vunpack.c.l.b16 %v359
    %v924 = vunpack.c.h.b16 %v359
    %v925 = vunpack.c.l.b16 %v360
    %v926 = vunpack.c.h.b16 %v360
    %v927 = vunpack.c.l.b16 %v361
    %v928 = vunpack.c.h.b16 %v361
    %v929 = vunpack.c.l.b16 %v362
    %v930 = vunpack.c.h.b16 %v362
    %v931 = vunpack.c.l.b16 %v363
    %v932 = vunpack.c.h.b16 %v363
    %v933 = vunpack.c.l.b16 %v364
    %v934 = vunpack.c.h.b16 %v364
    %v935 = vunpack.c.l.b16 %v365
    %v936 = vunpack.c.h.b16 %v365
    %v937 = vunpack.c.l.b16 %v366
    %v938 = vunpack.c.h.b16 %v366
    %v939 = vunpack.c.l.b16 %v367
    %v940 = vunpack.c.h.b16 %v367
    %v941 = vunpack.c.l.b16 %v368
    %v942 = vunpack.c.h.b16 %v368
    %v943 = vunpack.c.l.b16 %v369
    %v944 = vunpack.c.h.b16 %v369
    %v945 = vunpack.c.l.b16 %v370
    %v946 = vunpack.c.h.b16 %v370
    %v947 = vunpack.c.l.b16 %v371
    %v948 = vunpack.c.h.b16 %v371
    %v949 = vunpack.c.l.b16 %v372
    %v950 = vunpack.c.h.b16 %v372
    %v951 = vunpack.c.l.b16 %v373
    %v952 = vunpack.c.h.b16 %v373
    %v953 = vunpack.c.l.b16 %v374
    %v954 = vunpack.c.h.b16 %v374
    %v955 = vunpack.c.l.b16 %v375
    %v956 = vunpack.c.h.b16 %v375
    %v957 = vunpack.c.l.b16 %v376
    %v958 = vunpack.c.h.b16 %v376
    %v959 = vunpack.c.l.b16 %v377
    %v960 = vunpack.c.h.b16 %v377
    %v961 = vunpack.c.l.b16 %v378
    %v962 = vunpack.c.h.b16 %v378
    %v963 = vunpack.c.l.b16 %v379
    %v964 = vunpack.c.h.b16 %v379
    %v965 = vunpack.c.l.b16 %v380
    %v966 = vunpack.c.h.b16 %v380
    %v967 = vunpack.c.l.b16 %v381
    %v968 = vunpack.c.h.b16 %v381
    %v969 = vunpack.c.l.b16 %v382
    %v970 = vunpack.c.h.b16 %v382
    %v971 = vunpack.c.l.b16 %v383
    %v972 = vunpack.c.h.b16 %v383
    %v973 = vunpack.c.l.b16 %v384
    %v974 = vunpack.c.h.b16 %v384
    %v975 = vunpack.c.l.b16 %v385
    %v976 = vunpack.c.h.b16 %v385
    %v977 = vunpack.c.l.b16 %v386
    %v978 = vunpack.c.h.b16 %v386
    %v979 = vunpack.c.l.b16 %v387
    %v980 = vunpack.c.h.b16 %v387
    %v981 = vunpack.c.l.b16 %v388
    %v982 = vunpack.c.h.b16 %v388
    %v983 = vunpack.c.l.b16 %v389
    %v984 = vunpack.c.h.b16 %v389
    %v985 = vunpack.c.l.b16 %v390
    %v986 = vunpack.c.h.b16 %v390
    %v987 = vunpack.c.l.b16 %v391
    %v988 = vunpack.c.h.b16 %v391
    %v989 = vunpack.c.l.b16 %v392
    %v990 = vunpack.c.h.b16 %v392
    %v991 = vunpack.c.l.b16 %v393
    %v992 = vunpack.c.h.b16 %v393
    %v993 = vunpack.c.l.b16 %v394
    %v994 = vunpack.c.h.b16 %v394
    %v995 = vunpack.c.l.b16 %v395
    %v996 = vunpack.c.h.b16 %v395
    %v997 = vunpack.c.l.b16 %v396
    %v998 = vunpack.c.h.b16 %v396
    %v999 = vunpack.c.l.b16 %v397
    %v1000 = vunpack.c.h.b16 %v397
    %v1001 = vunpack.c.l.b16 %v398
    %v1002 = vunpack.c.h.b16 %v398
    %v1003 = vunpack.c.l.b16 %v399
    %v1004 = vunpack.c.h.b16 %v399
    %v1005 = vunpack.c.l.b16 %v400
    %v1006 = vunpack.c.h.b16 %v400
    %v1007 = vunpack.c.l.b16 %v401
    %v1008 = vunpack.c.h.b16 %v401
    %v1009 = vunpack.c.l.b16 %v402
    %v1010 = vunpack.c.h.b16 %v402
    %v1011 = vunpack.c.l.b16 %v403
    %v1012 = vunpack.c.h.b16 %v403
    %v1013 = vunpack.c.l.b16 %v404
    %v1014 = vunpack.c.h.b16 %v404
    %v1015 = vpack.c.b16 %v627, %v623
    %v1016 = vpack.c.b16 %v628, %v624
    %v1017 = vpack.c.b16 %v629, %v625
    %v1018 = vpack.c.b16 %v630, %v626
    %v1019 = vpack.c.b16 %v635, %v631
    %v1020 = vpack.c.b16 %v636, %v632
    %v1021 = vpack.c.b16 %v637, %v633
    %v1022 = vpack.c.b16 %v638, %v634
    %v1023 = vpack.c.b16 %v643, %v639
    %v1024 = vpack.c.b16 %v644, %v640
    %v1025 = vpack.c.b16 %v645, %v641
    %v1026 = vpack.c.b16 %v646, %v642
    %v1027 = vpack.c.b16 %v651, %v647
    %v1028 = vpack.c.b16 %v652, %v648
    %v1029 = vpack.c.b16 %v653, %v649
    %v1030 = vpack.c.b16 %v654, %v650
    %v1031 = vpack.c.b16 %v659, %v655
    %v1032 = vpack.c.b16 %v660, %v656
    %v1033 = vpack.c.b16 %v661, %v657
    %v1034 = vpack.c.b16 %v662, %v658
    %v1035 = vpack.c.b16 %v667, %v663
    %v1036 = vpack.c.b16 %v668, %v664
    %v1037 = vpack.c.b16 %v669, %v665
    %v1038 = vpack.c.b16 %v670, %v666
    %v1039 = vpack.c.b16 %v675, %v671
    %v1040 = vpack.c.b16 %v676, %v672
    %v1041 = vpack.c.b16 %v677, %v673
    %v1042 = vpack.c.b16 %v678, %v674
    %v1043 = vpack.c.b16 %v683, %v679
    %v1044 = vpack.c.b16 %v684, %v680
    %v1045 = vpack.c.b16 %v685, %v681
    %v1046 = vpack.c.b16 %v686, %v682
    %v1047 = vpack.c.b16 %v691, %v687
    %v1048 = vpack.c.b16 %v692, %v688
    %v1049 = vpack.c.b16 %v693, %v689
    %v1050 = vpack.c.b16 %v694, %v690
    %v1051 = vpack.c.b16 %v699, %v695
    %v1052 = vpack.c.b16 %v700, %v696
    %v1053 = vpack.c.b16 %v701, %v697
    %v1054 = vpack.c.b16 %v702, %v698
    %v1055 = vpack.c.b16 %v707, %v703
    %v1056 = vpack.c.b16 %v708, %v704
    %v1057 = vpack.c.b16 %v709, %v705
    %v1058 = vpack.c.b16 %v710, %v706
    %v1059 = vpack.c.b16 %v715, %v711
    %v1060 = vpack.c.b16 %v716, %v712
    %v1061 = vpack.c.b16 %v717, %v713
    %v1062 = vpack.c.b16 %v718, %v714
    %v1063 = vpack.c.b16 %v723, %v719
    %v1064 = vpack.c.b16 %v724, %v720
    %v1065 = vpack.c.b16 %v725, %v721
    %v1066 = vpack.c.b16 %v726, %v722
    %v1067 = vpack.c.b16 %v731, %v727
    %v1068 = vpack.c.b16 %v732, %v728
    %v1069 = vpack.c.b16 %v733, %v729
    %v1070 = vpack.c.b16 %v734, %v730
    %v1071 = vpack.c.b16 %v739, %v735
    %v1072 = vpack.c.b16 %v740, %v736
    %v1073 = vpack.c.b16 %v741, %v737
    %v1074 = vpack.c.b16 %v742, %v738
    %v1075 = vpack.c.b16 %v747, %v743
    %v1076 = vpack.c.b16 %v748, %v744
    %v1077 = vpack.c.b16 %v749, %v745
    %v1078 = vpack.c.b16 %v750, %v746
    %v1079 = vpack.c.b16 %v755, %v751
    %v1080 = vpack.c.b16 %v756, %v752
    %v1081 = vpack.c.b16 %v757, %v753
    %v1082 = vpack.c.b16 %v758, %v754
    %v1083 = vpack.c.b16 %v763, %v759
    %v1084 = vpack.c.b16 %v764, %v760
    %v1085 = vpack.c.b16 %v765, %v761
    %v1086 = vpack.c.b16 %v766, %v762
    %v1087 = vpack.c.b16 %v771, %v767
    %v1088 = vpack.c.b16 %v772, %v768
    %v1089 = vpack.c.b16 %v773, %v769
    %v1090 = vpack.c.b16 %v774, %v770
    %v1091 = vpack.c.b16 %v779, %v775
    %v1092 = vpack.c.b16 %v780, %v776
    %v1093 = vpack.c.b16 %v781, %v777
    %v1094 = vpack.c.b16 %v782, %v778
    %v1095 = vpack.c.b16 %v787, %v783
    %v1096 = vpack.c.b16 %v788, %v784
    %v1097 = vpack.c.b16 %v789, %v785
    %v1098 = vpack.c.b16 %v790, %v786
    %v1099 = vpack.c.b16 %v795, %v791
    %v1100 = vpack.c.b16 %v796, %v792
    %v1101 = vpack.c.b16 %v797, %v793
    %v1102 = vpack.c.b16 %v798, %v794
    %v1103 = vpack.c.b16 %v803, %v799
    %v1104 = vpack.c.b16 %v804, %v800
    %v1105 = vpack.c.b16 %v805, %v801
    %v1106 = vpack.c.b16 %v806, %v802
    %v1107 = vpack.c.b16 %v811, %v807
    %v1108 = vpack.c.b16 %v812, %v808
    %v1109 = vpack.c.b16 %v813, %v809
    %v1110 = vpack.c.b16 %v814, %v810
    %v1111 = vpack.c.b16 %v819, %v815
    %v1112 = vpack.c.b16 %v820, %v816
    %v1113 = vpack.c.b16 %v821, %v817
    %v1114 = vpack.c.b16 %v822, %v818
    %v1115 = vpack.c.b16 %v827, %v823
    %v1116 = vpack.c.b16 %v828, %v824
    %v1117 = vpack.c.b16 %v829, %v825
    %v1118 = vpack.c.b16 %v830, %v826
    %v1119 = vpack.c.b16 %v835, %v831
    %v1120 = vpack.c.b16 %v836, %v832
    %v1121 = vpack.c.b16 %v837, %v833
    %v1122 = vpack.c.b16 %v838, %v834
    %v1123 = vpack.c.b16 %v843, %v839
    %v1124 = vpack.c.b16 %v844, %v840
    %v1125 = vpack.c.b16 %v845, %v841
    %v1126 = vpack.c.b16 %v846, %v842
    %v1127 = vpack.c.b16 %v851, %v847
    %v1128 = vpack.c.b16 %v852, %v848
    %v1129 = vpack.c.b16 %v853, %v849
    %v1130 = vpack.c.b16 %v854, %v850
    %v1131 = vpack.c.b16 %v859, %v855
    %v1132 = vpack.c.b16 %v860, %v856
    %v1133 = vpack.c.b16 %v861, %v857
    %v1134 = vpack.c.b16 %v862, %v858
    %v1135 = vpack.c.b16 %v867, %v863
    %v1136 = vpack.c.b16 %v868, %v864
    %v1137 = vpack.c.b16 %v869, %v865
    %v1138 = vpack.c.b16 %v870, %v866
    %v1139 = vpack.c.b16 %v875, %v871
    %v1140 = vpack.c.b16 %v876, %v872
    %v1141 = vpack.c.b16 %v877, %v873
    %v1142 = vpack.c.b16 %v878, %v874
    %v1143 = vpack.c.b16 %v883, %v879
    %v1144 = vpack.c.b16 %v884, %v880
    %v1145 = vpack.c.b16 %v885, %v881
    %v1146 = vpack.c.b16 %v886, %v882
    %v1147 = vpack.c.b16 %v891, %v887
    %v1148 = vpack.c.b16 %v892, %v888
    %v1149 = vpack.c.b16 %v893, %v889
    %v1150 = vpack.c.b16 %v894, %v890
    %v1151 = vpack.c.b16 %v899, %v895
    %v1152 = vpack.c.b16 %v900, %v896
    %v1153 = vpack.c.b16 %v901, %v897
    %v1154 = vpack.c.b16 %v902, %v898
    %v1155 = vpack.c.b16 %v907, %v903
    %v1156 = vpack.c.b16 %v908, %v904
    %v1157 = vpack.c.b16 %v909, %v905
    %v1158 = vpack.c.b16 %v910, %v906
    %v1159 = vpack.c.b16 %v915, %v911
    %v1160 = vpack.c.b16 %v916, %v912
    %v1161 = vpack.c.b16 %v917, %v913
    %v1162 = vpack.c.b16 %v918, %v914
    %v1163 = vpack.c.b16 %v923, %v919
    %v1164 = vpack.c.b16 %v924, %v920
    %v1165 = vpack.c.b16 %v925, %v921
    %v1166 = vpack.c.b16 %v926, %v922
    %v1167 = vpack.c.b16 %v931, %v927
    %v1168 = vpack.c.b16 %v932, %v928
    %v1169 = vpack.c.b16 %v933, %v929
    %v1170 = vpack.c.b16 %v934, %v930
    %v1171 = vpack.c.b16 %v939, %v935
    %v1172 = vpack.c.b16 %v940, %v936
    %v1173 = vpack.c.b16 %v941, %v937
    %v1174 = vpack.c.b16 %v942, %v938
    %v1175 = vpack.c.b16 %v947, %v943
    %v1176 = vpack.c.b16 %v948, %v944
    %v1177 = vpack.c.b16 %v949, %v945
    %v1178 = vpack.c.b16 %v950, %v946
    %v1179 = vpack.c.b16 %v955, %v951
    %v1180 = vpack.c.b16 %v956, %v952
    %v1181 = vpack.c.b16 %v957, %v953
    %v1182 = vpack.c.b16 %v958, %v954
    %v1183 = vpack.c.b16 %v963, %v959
    %v1184 = vpack.c.b16 %v964, %v960
    %v1185 = vpack.c.b16 %v965, %v961
    %v1186 = vpack.c.b16 %v966, %v962
    %v1187 = vpack.c.b16 %v971, %v967
    %v1188 = vpack.c.b16 %v972, %v968
    %v1189 = vpack.c.b16 %v973, %v969
    %v1190 = vpack.c.b16 %v974, %v970
    %v1191 = vpack.c.b16 %v979, %v975
    %v1192 = vpack.c.b16 %v980, %v976
    %v1193 = vpack.c.b16 %v981, %v977
    %v1194 = vpack.c.b16 %v982, %v978
    %v1195 = vpack.c.b16 %v987, %v983
    %v1196 = vpack.c.b16 %v988, %v984
    %v1197 = vpack.c.b16 %v989, %v985
    %v1198 = vpack.c.b16 %v990, %v986
    %v1199 = vpack.c.b16 %v995, %v991
    %v1200 = vpack.c.b16 %v996, %v992
    %v1201 = vpack.c.b16 %v997, %v993
    %v1202 = vpack.c.b16 %v998, %v994
    %v1203 = vpack.c.b16 %v1003, %v999
    %v1204 = vpack.c.b16 %v1004, %v1000
    %v1205 = vpack.c.b16 %v1005, %v1001
    %v1206 = vpack.c.b16 %v1006, %v1002
    %v1207 = vpack.c.b16 %v1011, %v1007
    %v1208 = vpack.c.b16 %v1012, %v1008
    %v1209 = vpack.c.b16 %v1013, %v1009
    %v1210 = vpack.c.b16 %v1014, %v1010
    %vm1407 = vcmask 130048
    %v1409 = vsel %vm1407, %v159, 0
    %v1412 = vsel %vm1407, %v166, 0
    %v1415 = vsel %vm1407, %v173, 0
    %v1418 = vsel %vm1407, %v180, 0
    %v1421 = vsel %vm1407, %v187, 0
    %v1424 = vsel %vm1407, %v194, 0
    %v1427 = vsel %vm1407, %v201, 0
    %v1430 = vsel %vm1407, %v208, 0
    %1432 = vmatprep.subr.bf16.mxu0 %v1016
    %1433 = vmatpush1.bf16.msra.mxu0 %v1015
    %1434 = vmatprep.subr.bf16.mxu0 %v1020
    %1435 = vmatpush1.bf16.msra.mxu0 %v1019
    %1436 = vmatprep.subr.bf16.mxu0 %v1024
    %1437 = vmatpush1.bf16.msra.mxu0 %v1023
    %1438 = vmatprep.subr.bf16.mxu0 %v1028
    %1439 = vmatpush1.bf16.msra.mxu0 %v1027
    %1440 = vmatprep.subr.bf16.mxu0 %v1032
    %1441 = vmatpush1.bf16.msra.mxu0 %v1031
    %1442 = vmatprep.subr.bf16.mxu0 %v1036
    %1443 = vmatpush1.bf16.msra.mxu0 %v1035
    %1444 = vmatprep.subr.bf16.mxu0 %v1040
    %1445 = vmatpush1.bf16.msra.mxu0 %v1039
    %1446 = vmatprep.subr.bf16.mxu0 %v1044
    %1447 = vmatpush1.bf16.msra.mxu0 %v1043
    %1448 = vmatprep.subr.bf16.mxu0 %v1048
    %1449 = vmatpush1.bf16.msra.mxu0 %v1047
    %1450 = vmatprep.subr.bf16.mxu0 %v1052
    %1451 = vmatpush1.bf16.msra.mxu0 %v1051
    %1452 = vmatprep.subr.bf16.mxu0 %v1056
    %1453 = vmatpush1.bf16.msra.mxu0 %v1055
    %1454 = vmatprep.subr.bf16.mxu0 %v1060
    %1455 = vmatpush1.bf16.msra.mxu0 %v1059
    %1456 = vmatprep.subr.bf16.mxu0 %v1064
    %1457 = vmatpush1.bf16.msra.mxu0 %v1063
    %1458 = vmatprep.subr.bf16.mxu0 %v1068
    %1459 = vmatpush1.bf16.msra.mxu0 %v1067
    %1460 = vmatprep.subr.bf16.mxu0 %v1072
    %1461 = vmatpush1.bf16.msra.mxu0 %v1071
    %1462 = vmatprep.subr.bf16.mxu0 %v1076
    %1463 = vmatpush1.bf16.msra.mxu0 %v1075
    %1464 = vmatprep.mubr.bf16.mxu0 %v154
    %1465 = vmatmul.mubr.bf16.gmra.mrb[0].mxu0 %v153
    %v1466 = vpop.f32.mrb[0].mxu0
    %v1467 = vadd.f32 %v410, %v1466
    %v1468 = vpop.f32.mrb[0].mxu0
    %v1469 = vadd.f32 %v414, %v1468
    %v1470 = vpop.f32.mrb[0].mxu0
    %v1471 = vadd.f32 %v410, %v1470
    %v1472 = vpop.f32.mrb[0].mxu0
    %v1473 = vadd.f32 %v414, %v1472
    %1474 = vmatprep.mubr.bf16.mxu0 %v161
    %1475 = vmatmul.mubr.bf16.gmra.mrb[0].mxu0 %v160
    %v1476 = vpop.f32.mrb[0].mxu0
    %v1477 = vadd.f32 %v410, %v1476
    %v1478 = vpop.f32.mrb[0].mxu0
    %v1479 = vadd.f32 %v414, %v1478
    %v1480 = vpop.f32.mrb[0].mxu0
    %v1481 = vadd.f32 %v410, %v1480
    %v1482 = vpop.f32.mrb[0].mxu0
    %v1483 = vadd.f32 %v414, %v1482
    %1484 = vmatprep.mubr.bf16.mxu0 %v168
    %1485 = vmatmul.mubr.bf16.gmra.mrb[0].mxu0 %v167
    %v1486 = vpop.f32.mrb[0].mxu0
    %v1487 = vadd.f32 %v410, %v1486
    %v1488 = vpop.f32.mrb[0].mxu0
    %v1489 = vadd.f32 %v414, %v1488
    %v1490 = vpop.f32.mrb[0].mxu0
    %v1491 = vadd.f32 %v410, %v1490
    %v1492 = vpop.f32.mrb[0].mxu0
    %v1493 = vadd.f32 %v414, %v1492
    %1494 = vmatprep.mubr.bf16.mxu0 %v175
    %1495 = vmatmul.mubr.bf16.gmra.mrb[0].mxu0 %v174
    %v1496 = vpop.f32.mrb[0].mxu0
    %v1497 = vadd.f32 %v410, %v1496
    %v1498 = vpop.f32.mrb[0].mxu0
    %v1499 = vadd.f32 %v414, %v1498
    %v1500 = vpop.f32.mrb[0].mxu0
    %v1501 = vadd.f32 %v410, %v1500
    %v1502 = vpop.f32.mrb[0].mxu0
    %v1503 = vadd.f32 %v414, %v1502
    %1504 = vmatprep.mubr.bf16.mxu0 %v182
    %1505 = vmatmul.mubr.bf16.gmra.mrb[0].mxu0 %v181
    %v1506 = vpop.f32.mrb[0].mxu0
    %v1507 = vadd.f32 %v410, %v1506
    %v1508 = vpop.f32.mrb[0].mxu0
    %v1509 = vadd.f32 %v414, %v1508
    %v1510 = vpop.f32.mrb[0].mxu0
    %v1511 = vadd.f32 %v410, %v1510
    %v1512 = vpop.f32.mrb[0].mxu0
    %v1513 = vadd.f32 %v414, %v1512
    %1514 = vmatprep.mubr.bf16.mxu0 %v189
    %1515 = vmatmul.mubr.bf16.gmra.mrb[0].mxu0 %v188
    %v1516 = vpop.f32.mrb[0].mxu0
    %v1517 = vadd.f32 %v410, %v1516
    %v1518 = vpop.f32.mrb[0].mxu0
    %v1519 = vadd.f32 %v414, %v1518
    %v1520 = vpop.f32.mrb[0].mxu0
    %v1521 = vadd.f32 %v410, %v1520
    %v1522 = vpop.f32.mrb[0].mxu0
    %v1523 = vadd.f32 %v414, %v1522
    %1524 = vmatprep.mubr.bf16.mxu0 %v196
    %1525 = vmatmul.mubr.bf16.gmra.mrb[0].mxu0 %v195
    %v1526 = vpop.f32.mrb[0].mxu0
    %v1527 = vadd.f32 %v410, %v1526
    %v1528 = vpop.f32.mrb[0].mxu0
    %v1529 = vadd.f32 %v414, %v1528
    %v1530 = vpop.f32.mrb[0].mxu0
    %v1531 = vadd.f32 %v410, %v1530
    %v1532 = vpop.f32.mrb[0].mxu0
    %v1533 = vadd.f32 %v414, %v1532
    %1534 = vmatprep.mubr.bf16.mxu0 %v203
    %1535 = vmatmul.mubr.bf16.gmra.mrb[0].mxu0 %v202
    %v1536 = vpop.f32.mrb[0].mxu0
    %v1537 = vadd.f32 %v410, %v1536
    %v1538 = vpop.f32.mrb[0].mxu0
    %v1539 = vadd.f32 %v414, %v1538
    %v1540 = vpop.f32.mrb[0].mxu0
    %v1541 = vadd.f32 %v410, %v1540
    %v1542 = vpop.f32.mrb[0].mxu0
    %v1543 = vadd.f32 %v414, %v1542
    %1544 = vdwg.mxu0
    %1545 = vmatprep.subr.bf16.mxu0 %v1080
    %1546 = vmatpush1.bf16.msra.mxu0 %v1079
    %1547 = vmatprep.subr.bf16.mxu0 %v1084
    %1548 = vmatpush1.bf16.msra.mxu0 %v1083
    %1549 = vmatprep.subr.bf16.mxu0 %v1088
    %1550 = vmatpush1.bf16.msra.mxu0 %v1087
    %1551 = vmatprep.subr.bf16.mxu0 %v1092
    %1552 = vmatpush1.bf16.msra.mxu0 %v1091
    %1553 = vmatprep.subr.bf16.mxu0 %v1096
    %1554 = vmatpush1.bf16.msra.mxu0 %v1095
    %1555 = vmatprep.subr.bf16.mxu0 %v1100
    %1556 = vmatpush1.bf16.msra.mxu0 %v1099
    %1557 = vmatprep.subr.bf16.mxu0 %v1104
    %1558 = vmatpush1.bf16.msra.mxu0 %v1103
    %1559 = vmatprep.subr.bf16.mxu0 %v1108
    %1560 = vmatpush1.bf16.msra.mxu0 %v1107
    %1561 = vmatprep.subr.bf16.mxu0 %v1112
    %1562 = vmatpush1.bf16.msra.mxu0 %v1111
    %1563 = vmatprep.subr.bf16.mxu0 %v1116
    %1564 = vmatpush1.bf16.msra.mxu0 %v1115
    %1565 = vmatprep.subr.bf16.mxu0 %v1120
    %1566 = vmatpush1.bf16.msra.mxu0 %v1119
    %1567 = vmatprep.subr.bf16.mxu0 %v1124
    %1568 = vmatpush1.bf16.msra.mxu0 %v1123
    %1569 = vmatprep.subr.bf16.mxu0 %v1128
    %1570 = vmatpush1.bf16.msra.mxu0 %v1127
    %1571 = vmatprep.subr.bf16.mxu0 %v1132
    %1572 = vmatpush1.bf16.msra.mxu0 %v1131
    %1573 = vmatprep.subr.bf16.mxu0 %v1136
    %1574 = vmatpush1.bf16.msra.mxu0 %v1135
    %1575 = vmatprep.subr.bf16.mxu0 %v1140
    %1576 = vmatpush1.bf16.msra.mxu0 %v1139
    %1577 = vmatprep.mubr.bf16.mxu0 %v156
    %1578 = vmatmul.mubr.bf16.gmra.mrb[0].mxu0 %v155
    %v1579 = vpop.f32.mrb[0].mxu0
    %v1580 = vadd.f32 %v1467, %v1579
    %v1581 = vpop.f32.mrb[0].mxu0
    %v1582 = vadd.f32 %v1469, %v1581
    %v1583 = vpop.f32.mrb[0].mxu0
    %v1584 = vadd.f32 %v1471, %v1583
    %v1585 = vpop.f32.mrb[0].mxu0
    %v1586 = vadd.f32 %v1473, %v1585
    %1587 = vmatprep.mubr.bf16.mxu0 %v163
    %1588 = vmatmul.mubr.bf16.gmra.mrb[0].mxu0 %v162
    %v1589 = vpop.f32.mrb[0].mxu0
    %v1590 = vadd.f32 %v1477, %v1589
    %v1591 = vpop.f32.mrb[0].mxu0
    %v1592 = vadd.f32 %v1479, %v1591
    %v1593 = vpop.f32.mrb[0].mxu0
    %v1594 = vadd.f32 %v1481, %v1593
    %v1595 = vpop.f32.mrb[0].mxu0
    %v1596 = vadd.f32 %v1483, %v1595
    %1597 = vmatprep.mubr.bf16.mxu0 %v170
    %1598 = vmatmul.mubr.bf16.gmra.mrb[0].mxu0 %v169
    %v1599 = vpop.f32.mrb[0].mxu0
    %v1600 = vadd.f32 %v1487, %v1599
    %v1601 = vpop.f32.mrb[0].mxu0
    %v1602 = vadd.f32 %v1489, %v1601
    %v1603 = vpop.f32.mrb[0].mxu0
    %v1604 = vadd.f32 %v1491, %v1603
    %v1605 = vpop.f32.mrb[0].mxu0
    %v1606 = vadd.f32 %v1493, %v1605
    %1607 = vmatprep.mubr.bf16.mxu0 %v177
    %1608 = vmatmul.mubr.bf16.gmra.mrb[0].mxu0 %v176
    %v1609 = vpop.f32.mrb[0].mxu0
    %v1610 = vadd.f32 %v1497, %v1609
    %v1611 = vpop.f32.mrb[0].mxu0
    %v1612 = vadd.f32 %v1499, %v1611
    %v1613 = vpop.f32.mrb[0].mxu0
    %v1614 = vadd.f32 %v1501, %v1613
    %v1615 = vpop.f32.mrb[0].mxu0
    %v1616 = vadd.f32 %v1503, %v1615
    %1617 = vmatprep.mubr.bf16.mxu0 %v184
    %1618 = vmatmul.mubr.bf16.gmra.mrb[0].mxu0 %v183
    %v1619 = vpop.f32.mrb[0].mxu0
    %v1620 = vadd.f32 %v1507, %v1619
    %v1621 = vpop.f32.mrb[0].mxu0
    %v1622 = vadd.f32 %v1509, %v1621
    %v1623 = vpop.f32.mrb[0].mxu0
    %v1624 = vadd.f32 %v1511, %v1623
    %v1625 = vpop.f32.mrb[0].mxu0
    %v1626 = vadd.f32 %v1513, %v1625
    %1627 = vmatprep.mubr.bf16.mxu0 %v191
    %1628 = vmatmul.mubr.bf16.gmra.mrb[0].mxu0 %v190
    %v1629 = vpop.f32.mrb[0].mxu0
    %v1630 = vadd.f32 %v1517, %v1629
    %v1631 = vpop.f32.mrb[0].mxu0
    %v1632 = vadd.f32 %v1519, %v1631
    %v1633 = vpop.f32.mrb[0].mxu0
    %v1634 = vadd.f32 %v1521, %v1633
    %v1635 = vpop.f32.mrb[0].mxu0
    %v1636 = vadd.f32 %v1523, %v1635
    %1637 = vmatprep.mubr.bf16.mxu0 %v198
    %1638 = vmatmul.mubr.bf16.gmra.mrb[0].mxu0 %v197
    %v1639 = vpop.f32.mrb[0].mxu0
    %v1640 = vadd.f32 %v1527, %v1639
    %v1641 = vpop.f32.mrb[0].mxu0
    %v1642 = vadd.f32 %v1529, %v1641
    %v1643 = vpop.f32.mrb[0].mxu0
    %v1644 = vadd.f32 %v1531, %v1643
    %v1645 = vpop.f32.mrb[0].mxu0
    %v1646 = vadd.f32 %v1533, %v1645
    %1647 = vmatprep.mubr.bf16.mxu0 %v205
    %1648 = vmatmul.mubr.bf16.gmra.mrb[0].mxu0 %v204
    %v1649 = vpop.f32.mrb[0].mxu0
    %v1650 = vadd.f32 %v1537, %v1649
    %v1651 = vpop.f32.mrb[0].mxu0
    %v1652 = vadd.f32 %v1539, %v1651
    %v1653 = vpop.f32.mrb[0].mxu0
    %v1654 = vadd.f32 %v1541, %v1653
    %v1655 = vpop.f32.mrb[0].mxu0
    %v1656 = vadd.f32 %v1543, %v1655
    %1657 = vdwg.mxu0
    %1658 = vmatprep.subr.bf16.mxu0 %v1144
    %1659 = vmatpush1.bf16.msra.mxu0 %v1143
    %1660 = vmatprep.subr.bf16.mxu0 %v1148
    %1661 = vmatpush1.bf16.msra.mxu0 %v1147
    %1662 = vmatprep.subr.bf16.mxu0 %v1152
    %1663 = vmatpush1.bf16.msra.mxu0 %v1151
    %1664 = vmatprep.subr.bf16.mxu0 %v1156
    %1665 = vmatpush1.bf16.msra.mxu0 %v1155
    %1666 = vmatprep.subr.bf16.mxu0 %v1160
    %1667 = vmatpush1.bf16.msra.mxu0 %v1159
    %1668 = vmatprep.subr.bf16.mxu0 %v1164
    %1669 = vmatpush1.bf16.msra.mxu0 %v1163
    %1670 = vmatprep.subr.bf16.mxu0 %v1168
    %1671 = vmatpush1.bf16.msra.mxu0 %v1167
    %1672 = vmatprep.subr.bf16.mxu0 %v1172
    %1673 = vmatpush1.bf16.msra.mxu0 %v1171
    %1674 = vmatprep.subr.bf16.mxu0 %v1176
    %1675 = vmatpush1.bf16.msra.mxu0 %v1175
    %1676 = vmatprep.subr.bf16.mxu0 %v1180
    %1677 = vmatpush1.bf16.msra.mxu0 %v1179
    %1678 = vmatprep.subr.bf16.mxu0 %v1184
    %1679 = vmatpush1.bf16.msra.mxu0 %v1183
    %1680 = vmatprep.subr.bf16.mxu0 %v1188
    %1681 = vmatpush1.bf16.msra.mxu0 %v1187
    %1682 = vmatprep.subr.bf16.mxu0 %v1192
    %1683 = vmatpush1.bf16.msra.mxu0 %v1191
    %1684 = vmatprep.subr.bf16.mxu0 %v1196
    %1685 = vmatpush1.bf16.msra.mxu0 %v1195
    %1686 = vmatprep.subr.bf16.mxu0 %v1200
    %1687 = vmatpush1.bf16.msra.mxu0 %v1199
    %1688 = vmatprep.subr.bf16.mxu0 %v1204
    %1689 = vmatpush1.bf16.msra.mxu0 %v1203
    %1690 = vmatprep.mubr.bf16.mxu0 %v158
    %1691 = vmatmul.mubr.bf16.gmra.mrb[0].mxu0 %v157
    %v1692 = vpop.f32.mrb[0].mxu0
    %v1693 = vadd.f32 %v1580, %v1692
    %v1694 = vpop.f32.mrb[0].mxu0
    %v1695 = vadd.f32 %v1582, %v1694
    %v1696 = vpop.f32.mrb[0].mxu0
    %v1697 = vadd.f32 %v1584, %v1696
    %v1698 = vpop.f32.mrb[0].mxu0
    %v1699 = vadd.f32 %v1586, %v1698
    %1700 = vmatprep.mubr.bf16.mxu0 %v165
    %1701 = vmatmul.mubr.bf16.gmra.mrb[0].mxu0 %v164
    %v1702 = vpop.f32.mrb[0].mxu0
    %v1703 = vadd.f32 %v1590, %v1702
    %v1704 = vpop.f32.mrb[0].mxu0
    %v1705 = vadd.f32 %v1592, %v1704
    %v1706 = vpop.f32.mrb[0].mxu0
    %v1707 = vadd.f32 %v1594, %v1706
    %v1708 = vpop.f32.mrb[0].mxu0
    %v1709 = vadd.f32 %v1596, %v1708
    %1710 = vmatprep.mubr.bf16.mxu0 %v172
    %1711 = vmatmul.mubr.bf16.gmra.mrb[0].mxu0 %v171
    %v1712 = vpop.f32.mrb[0].mxu0
    %v1713 = vadd.f32 %v1600, %v1712
    %v1714 = vpop.f32.mrb[0].mxu0
    %v1715 = vadd.f32 %v1602, %v1714
    %v1716 = vpop.f32.mrb[0].mxu0
    %v1717 = vadd.f32 %v1604, %v1716
    %v1718 = vpop.f32.mrb[0].mxu0
    %v1719 = vadd.f32 %v1606, %v1718
    %1720 = vmatprep.mubr.bf16.mxu0 %v179
    %1721 = vmatmul.mubr.bf16.gmra.mrb[0].mxu0 %v178
    %v1722 = vpop.f32.mrb[0].mxu0
    %v1723 = vadd.f32 %v1610, %v1722
    %v1724 = vpop.f32.mrb[0].mxu0
    %v1725 = vadd.f32 %v1612, %v1724
    %v1726 = vpop.f32.mrb[0].mxu0
    %v1727 = vadd.f32 %v1614, %v1726
    %v1728 = vpop.f32.mrb[0].mxu0
    %v1729 = vadd.f32 %v1616, %v1728
    %1730 = vmatprep.mubr.bf16.mxu0 %v186
    %1731 = vmatmul.mubr.bf16.gmra.mrb[0].mxu0 %v185
    %v1732 = vpop.f32.mrb[0].mxu0
    %v1733 = vadd.f32 %v1620, %v1732
    %v1734 = vpop.f32.mrb[0].mxu0
    %v1735 = vadd.f32 %v1622, %v1734
    %v1736 = vpop.f32.mrb[0].mxu0
    %v1737 = vadd.f32 %v1624, %v1736
    %v1738 = vpop.f32.mrb[0].mxu0
    %v1739 = vadd.f32 %v1626, %v1738
    %1740 = vmatprep.mubr.bf16.mxu0 %v193
    %1741 = vmatmul.mubr.bf16.gmra.mrb[0].mxu0 %v192
    %v1742 = vpop.f32.mrb[0].mxu0
    %v1743 = vadd.f32 %v1630, %v1742
    %v1744 = vpop.f32.mrb[0].mxu0
    %v1745 = vadd.f32 %v1632, %v1744
    %v1746 = vpop.f32.mrb[0].mxu0
    %v1747 = vadd.f32 %v1634, %v1746
    %v1748 = vpop.f32.mrb[0].mxu0
    %v1749 = vadd.f32 %v1636, %v1748
    %1750 = vmatprep.mubr.bf16.mxu0 %v200
    %1751 = vmatmul.mubr.bf16.gmra.mrb[0].mxu0 %v199
    %v1752 = vpop.f32.mrb[0].mxu0
    %v1753 = vadd.f32 %v1640, %v1752
    %v1754 = vpop.f32.mrb[0].mxu0
    %v1755 = vadd.f32 %v1642, %v1754
    %v1756 = vpop.f32.mrb[0].mxu0
    %v1757 = vadd.f32 %v1644, %v1756
    %v1758 = vpop.f32.mrb[0].mxu0
    %v1759 = vadd.f32 %v1646, %v1758
    %1760 = vmatprep.mubr.bf16.mxu0 %v207
    %1761 = vmatmul.mubr.bf16.gmra.mrb[0].mxu0 %v206
    %v1762 = vpop.f32.mrb[0].mxu0
    %v1763 = vadd.f32 %v1650, %v1762
    %v1764 = vpop.f32.mrb[0].mxu0
    %v1765 = vadd.f32 %v1652, %v1764
    %v1766 = vpop.f32.mrb[0].mxu0
    %v1767 = vadd.f32 %v1654, %v1766
    %v1768 = vpop.f32.mrb[0].mxu0
    %v1769 = vadd.f32 %v1656, %v1768
    %1770 = vdwg.mxu0
    %1771 = vmatprep.subr.bf16.mxu0 %v1208
    %1772 = vmatpush1.bf16.msra.mxu0 %v1207
    %1773 = vmatprep.subr.bf16.mxu0 0
    %1774 = vmatpush1.bf16.msra.mxu0 0
    %1775 = vmatprep.subr.bf16.mxu0 0
    %1776 = vmatpush1.bf16.msra.mxu0 0
    %1777 = vmatprep.subr.bf16.mxu0 0
    %1778 = vmatpush1.bf16.msra.mxu0 0
    %1779 = vmatprep.subr.bf16.mxu0 0
    %1780 = vmatpush1.bf16.msra.mxu0 0
    %1781 = vmatprep.subr.bf16.mxu0 0
    %1782 = vmatpush1.bf16.msra.mxu0 0
    %1783 = vmatprep.subr.bf16.mxu0 0
    %1784 = vmatpush1.bf16.msra.mxu0 0
    %1785 = vmatprep.subr.bf16.mxu0 0
    %1786 = vmatpush1.bf16.msra.mxu0 0
    %1787 = vmatprep.subr.bf16.mxu0 0
    %1788 = vmatpush1.bf16.msra.mxu0 0
    %1789 = vmatprep.subr.bf16.mxu0 0
    %1790 = vmatpush1.bf16.msra.mxu0 0
    %1791 = vmatprep.subr.bf16.mxu0 0
    %1792 = vmatpush1.bf16.msra.mxu0 0
    %1793 = vmatprep.subr.bf16.mxu0 0
    %1794 = vmatpush1.bf16.msra.mxu0 0
    %1795 = vmatprep.subr.bf16.mxu0 0
    %1796 = vmatpush1.bf16.msra.mxu0 0
    %1797 = vmatprep.subr.bf16.mxu0 0
    %1798 = vmatpush1.bf16.msra.mxu0 0
    %1799 = vmatprep.subr.bf16.mxu0 0
    %1800 = vmatpush1.bf16.msra.mxu0 0
    %1801 = vmatprep.subr.bf16.mxu0 0
    %1802 = vmatpush1.bf16.msra.mxu0 0
    %1803 = vmatprep.mubr.bf16.mxu0 0
    %1804 = vmatmul.mubr.bf16.gmra.mrb[0].mxu0 %v1409
    %v1805 = vpop.f32.mrb[0].mxu0
    %v1806 = vadd.f32 %v1693, %v1805
    %v1807 = vpop.f32.mrb[0].mxu0
    %v1808 = vadd.f32 %v1695, %v1807
    %v1809 = vpop.f32.mrb[0].mxu0
    %v1810 = vadd.f32 %v1697, %v1809
    %v1811 = vpop.f32.mrb[0].mxu0
    %v1812 = vadd.f32 %v1699, %v1811
    %1813 = vmatprep.mubr.bf16.mxu0 0
    %1814 = vmatmul.mubr.bf16.gmra.mrb[0].mxu0 %v1412
    %v1815 = vpop.f32.mrb[0].mxu0
    %v1816 = vadd.f32 %v1703, %v1815
    %v1817 = vpop.f32.mrb[0].mxu0
    %v1818 = vadd.f32 %v1705, %v1817
    %v1819 = vpop.f32.mrb[0].mxu0
    %v1820 = vadd.f32 %v1707, %v1819
    %v1821 = vpop.f32.mrb[0].mxu0
    %v1822 = vadd.f32 %v1709, %v1821
    %1823 = vmatprep.mubr.bf16.mxu0 0
    %1824 = vmatmul.mubr.bf16.gmra.mrb[0].mxu0 %v1415
    %v1825 = vpop.f32.mrb[0].mxu0
    %v1826 = vadd.f32 %v1713, %v1825
    %v1827 = vpop.f32.mrb[0].mxu0
    %v1828 = vadd.f32 %v1715, %v1827
    %v1829 = vpop.f32.mrb[0].mxu0
    %v1830 = vadd.f32 %v1717, %v1829
    %v1831 = vpop.f32.mrb[0].mxu0
    %v1832 = vadd.f32 %v1719, %v1831
    %1833 = vmatprep.mubr.bf16.mxu0 0
    %1834 = vmatmul.mubr.bf16.gmra.mrb[0].mxu0 %v1418
    %v1835 = vpop.f32.mrb[0].mxu0
    %v1836 = vadd.f32 %v1723, %v1835
    %v1837 = vpop.f32.mrb[0].mxu0
    %v1838 = vadd.f32 %v1725, %v1837
    %v1839 = vpop.f32.mrb[0].mxu0
    %v1840 = vadd.f32 %v1727, %v1839
    %v1841 = vpop.f32.mrb[0].mxu0
    %v1842 = vadd.f32 %v1729, %v1841
    %1843 = vmatprep.mubr.bf16.mxu0 0
    %1844 = vmatmul.mubr.bf16.gmra.mrb[0].mxu0 %v1421
    %v1845 = vpop.f32.mrb[0].mxu0
    %v1846 = vadd.f32 %v1733, %v1845
    %v1847 = vpop.f32.mrb[0].mxu0
    %v1848 = vadd.f32 %v1735, %v1847
    %v1849 = vpop.f32.mrb[0].mxu0
    %v1850 = vadd.f32 %v1737, %v1849
    %v1851 = vpop.f32.mrb[0].mxu0
    %v1852 = vadd.f32 %v1739, %v1851
    %1853 = vmatprep.mubr.bf16.mxu0 0
    %1854 = vmatmul.mubr.bf16.gmra.mrb[0].mxu0 %v1424
    %v1855 = vpop.f32.mrb[0].mxu0
    %v1856 = vadd.f32 %v1743, %v1855
    %v1857 = vpop.f32.mrb[0].mxu0
    %v1858 = vadd.f32 %v1745, %v1857
    %v1859 = vpop.f32.mrb[0].mxu0
    %v1860 = vadd.f32 %v1747, %v1859
    %v1861 = vpop.f32.mrb[0].mxu0
    %v1862 = vadd.f32 %v1749, %v1861
    %1863 = vmatprep.mubr.bf16.mxu0 0
    %1864 = vmatmul.mubr.bf16.gmra.mrb[0].mxu0 %v1427
    %v1865 = vpop.f32.mrb[0].mxu0
    %v1866 = vadd.f32 %v1753, %v1865
    %v1867 = vpop.f32.mrb[0].mxu0
    %v1868 = vadd.f32 %v1755, %v1867
    %v1869 = vpop.f32.mrb[0].mxu0
    %v1870 = vadd.f32 %v1757, %v1869
    %v1871 = vpop.f32.mrb[0].mxu0
    %v1872 = vadd.f32 %v1759, %v1871
    %1873 = vmatprep.mubr.bf16.mxu0 0
    %1874 = vmatmul.mubr.bf16.gmra.mrb[0].mxu0 %v1430
    %v1875 = vpop.f32.mrb[0].mxu0
    %v1876 = vadd.f32 %v1763, %v1875
    %v1877 = vpop.f32.mrb[0].mxu0
    %v1878 = vadd.f32 %v1765, %v1877
    %v1879 = vpop.f32.mrb[0].mxu0
    %v1880 = vadd.f32 %v1767, %v1879
    %v1881 = vpop.f32.mrb[0].mxu0
    %v1882 = vadd.f32 %v1769, %v1881
    %1883 = vdwg.mxu0
    %1884 = vmatprep.subr.bf16.mxu0 %v1018
    %1885 = vmatpush1.bf16.msra.mxu0 %v1017
    %1886 = vmatprep.subr.bf16.mxu0 %v1022
    %1887 = vmatpush1.bf16.msra.mxu0 %v1021
    %1888 = vmatprep.subr.bf16.mxu0 %v1026
    %1889 = vmatpush1.bf16.msra.mxu0 %v1025
    %1890 = vmatprep.subr.bf16.mxu0 %v1030
    %1891 = vmatpush1.bf16.msra.mxu0 %v1029
    %1892 = vmatprep.subr.bf16.mxu0 %v1034
    %1893 = vmatpush1.bf16.msra.mxu0 %v1033
    %1894 = vmatprep.subr.bf16.mxu0 %v1038
    %1895 = vmatpush1.bf16.msra.mxu0 %v1037
    %1896 = vmatprep.subr.bf16.mxu0 %v1042
    %1897 = vmatpush1.bf16.msra.mxu0 %v1041
    %1898 = vmatprep.subr.bf16.mxu0 %v1046
    %1899 = vmatpush1.bf16.msra.mxu0 %v1045
    %1900 = vmatprep.subr.bf16.mxu0 %v1050
    %1901 = vmatpush1.bf16.msra.mxu0 %v1049
    %1902 = vmatprep.subr.bf16.mxu0 %v1054
    %1903 = vmatpush1.bf16.msra.mxu0 %v1053
    %1904 = vmatprep.subr.bf16.mxu0 %v1058
    %1905 = vmatpush1.bf16.msra.mxu0 %v1057
    %1906 = vmatprep.subr.bf16.mxu0 %v1062
    %1907 = vmatpush1.bf16.msra.mxu0 %v1061
    %1908 = vmatprep.subr.bf16.mxu0 %v1066
    %1909 = vmatpush1.bf16.msra.mxu0 %v1065
    %1910 = vmatprep.subr.bf16.mxu0 %v1070
    %1911 = vmatpush1.bf16.msra.mxu0 %v1069
    %1912 = vmatprep.subr.bf16.mxu0 %v1074
    %1913 = vmatpush1.bf16.msra.mxu0 %v1073
    %1914 = vmatprep.subr.bf16.mxu0 %v1078
    %1915 = vmatpush1.bf16.msra.mxu0 %v1077
    %1916 = vmatprep.mubr.bf16.mxu0 %v154
    %1917 = vmatmul.mubr.bf16.gmra.mrb[0].mxu0 %v153
    %v1918 = vpop.f32.mrb[0].mxu0
    %v1919 = vadd.f32 %v418, %v1918
    %v1920 = vpop.f32.mrb[0].mxu0
    %v1921 = vadd.f32 %v422, %v1920
    %v1922 = vpop.f32.mrb[0].mxu0
    %v1923 = vadd.f32 %v418, %v1922
    %v1924 = vpop.f32.mrb[0].mxu0
    %v1925 = vadd.f32 %v422, %v1924
    %1926 = vmatprep.mubr.bf16.mxu0 %v161
    %1927 = vmatmul.mubr.bf16.gmra.mrb[0].mxu0 %v160
    %v1928 = vpop.f32.mrb[0].mxu0
    %v1929 = vadd.f32 %v418, %v1928
    %v1930 = vpop.f32.mrb[0].mxu0
    %v1931 = vadd.f32 %v422, %v1930
    %v1932 = vpop.f32.mrb[0].mxu0
    %v1933 = vadd.f32 %v418, %v1932
    %v1934 = vpop.f32.mrb[0].mxu0
    %v1935 = vadd.f32 %v422, %v1934
    %1936 = vmatprep.mubr.bf16.mxu0 %v168
    %1937 = vmatmul.mubr.bf16.gmra.mrb[0].mxu0 %v167
    %v1938 = vpop.f32.mrb[0].mxu0
    %v1939 = vadd.f32 %v418, %v1938
    %v1940 = vpop.f32.mrb[0].mxu0
    %v1941 = vadd.f32 %v422, %v1940
    %v1942 = vpop.f32.mrb[0].mxu0
    %v1943 = vadd.f32 %v418, %v1942
    %v1944 = vpop.f32.mrb[0].mxu0
    %v1945 = vadd.f32 %v422, %v1944
    %1946 = vmatprep.mubr.bf16.mxu0 %v175
    %1947 = vmatmul.mubr.bf16.gmra.mrb[0].mxu0 %v174
    %v1948 = vpop.f32.mrb[0].mxu0
    %v1949 = vadd.f32 %v418, %v1948
    %v1950 = vpop.f32.mrb[0].mxu0
    %v1951 = vadd.f32 %v422, %v1950
    %v1952 = vpop.f32.mrb[0].mxu0
    %v1953 = vadd.f32 %v418, %v1952
    %v1954 = vpop.f32.mrb[0].mxu0
    %v1955 = vadd.f32 %v422, %v1954
    %1956 = vmatprep.mubr.bf16.mxu0 %v182
    %1957 = vmatmul.mubr.bf16.gmra.mrb[0].mxu0 %v181
    %v1958 = vpop.f32.mrb[0].mxu0
    %v1959 = vadd.f32 %v418, %v1958
    %v1960 = vpop.f32.mrb[0].mxu0
    %v1961 = vadd.f32 %v422, %v1960
    %v1962 = vpop.f32.mrb[0].mxu0
    %v1963 = vadd.f32 %v418, %v1962
    %v1964 = vpop.f32.mrb[0].mxu0
    %v1965 = vadd.f32 %v422, %v1964
    %1966 = vmatprep.mubr.bf16.mxu0 %v189
    %1967 = vmatmul.mubr.bf16.gmra.mrb[0].mxu0 %v188
    %v1968 = vpop.f32.mrb[0].mxu0
    %v1969 = vadd.f32 %v418, %v1968
    %v1970 = vpop.f32.mrb[0].mxu0
    %v1971 = vadd.f32 %v422, %v1970
    %v1972 = vpop.f32.mrb[0].mxu0
    %v1973 = vadd.f32 %v418, %v1972
    %v1974 = vpop.f32.mrb[0].mxu0
    %v1975 = vadd.f32 %v422, %v1974
    %1976 = vmatprep.mubr.bf16.mxu0 %v196
    %1977 = vmatmul.mubr.bf16.gmra.mrb[0].mxu0 %v195
    %v1978 = vpop.f32.mrb[0].mxu0
    %v1979 = vadd.f32 %v418, %v1978
    %v1980 = vpop.f32.mrb[0].mxu0
    %v1981 = vadd.f32 %v422, %v1980
    %v1982 = vpop.f32.mrb[0].mxu0
    %v1983 = vadd.f32 %v418, %v1982
    %v1984 = vpop.f32.mrb[0].mxu0
    %v1985 = vadd.f32 %v422, %v1984
    %1986 = vmatprep.mubr.bf16.mxu0 %v203
    %1987 = vmatmul.mubr.bf16.gmra.mrb[0].mxu0 %v202
    %v1988 = vpop.f32.mrb[0].mxu0
    %v1989 = vadd.f32 %v418, %v1988
    %v1990 = vpop.f32.mrb[0].mxu0
    %v1991 = vadd.f32 %v422, %v1990
    %v1992 = vpop.f32.mrb[0].mxu0
    %v1993 = vadd.f32 %v418, %v1992
    %v1994 = vpop.f32.mrb[0].mxu0
    %v1995 = vadd.f32 %v422, %v1994
    %1996 = vdwg.mxu0
    %1997 = vmatprep.subr.bf16.mxu0 %v1082
    %1998 = vmatpush1.bf16.msra.mxu0 %v1081
    %1999 = vmatprep.subr.bf16.mxu0 %v1086
    %2000 = vmatpush1.bf16.msra.mxu0 %v1085
    %2001 = vmatprep.subr.bf16.mxu0 %v1090
    %2002 = vmatpush1.bf16.msra.mxu0 %v1089
    %2003 = vmatprep.subr.bf16.mxu0 %v1094
    %2004 = vmatpush1.bf16.msra.mxu0 %v1093
    %2005 = vmatprep.subr.bf16.mxu0 %v1098
    %2006 = vmatpush1.bf16.msra.mxu0 %v1097
    %2007 = vmatprep.subr.bf16.mxu0 %v1102
    %2008 = vmatpush1.bf16.msra.mxu0 %v1101
    %2009 = vmatprep.subr.bf16.mxu0 %v1106
    %2010 = vmatpush1.bf16.msra.mxu0 %v1105
    %2011 = vmatprep.subr.bf16.mxu0 %v1110
    %2012 = vmatpush1.bf16.msra.mxu0 %v1109
    %2013 = vmatprep.subr.bf16.mxu0 %v1114
    %2014 = vmatpush1.bf16.msra.mxu0 %v1113
    %2015 = vmatprep.subr.bf16.mxu0 %v1118
    %2016 = vmatpush1.bf16.msra.mxu0 %v1117
    %2017 = vmatprep.subr.bf16.mxu0 %v1122
    %2018 = vmatpush1.bf16.msra.mxu0 %v1121
    %2019 = vmatprep.subr.bf16.mxu0 %v1126
    %2020 = vmatpush1.bf16.msra.mxu0 %v1125
    %2021 = vmatprep.subr.bf16.mxu0 %v1130
    %2022 = vmatpush1.bf16.msra.mxu0 %v1129
    %2023 = vmatprep.subr.bf16.mxu0 %v1134
    %2024 = vmatpush1.bf16.msra.mxu0 %v1133
    %2025 = vmatprep.subr.bf16.mxu0 %v1138
    %2026 = vmatpush1.bf16.msra.mxu0 %v1137
    %2027 = vmatprep.subr.bf16.mxu0 %v1142
    %2028 = vmatpush1.bf16.msra.mxu0 %v1141
    %2029 = vmatprep.mubr.bf16.mxu0 %v156
    %2030 = vmatmul.mubr.bf16.gmra.mrb[0].mxu0 %v155
    %v2031 = vpop.f32.mrb[0].mxu0
    %v2032 = vadd.f32 %v1919, %v2031
    %v2033 = vpop.f32.mrb[0].mxu0
    %v2034 = vadd.f32 %v1921, %v2033
    %v2035 = vpop.f32.mrb[0].mxu0
    %v2036 = vadd.f32 %v1923, %v2035
    %v2037 = vpop.f32.mrb[0].mxu0
    %v2038 = vadd.f32 %v1925, %v2037
    %2039 = vmatprep.mubr.bf16.mxu0 %v163
    %2040 = vmatmul.mubr.bf16.gmra.mrb[0].mxu0 %v162
    %v2041 = vpop.f32.mrb[0].mxu0
    %v2042 = vadd.f32 %v1929, %v2041
    %v2043 = vpop.f32.mrb[0].mxu0
    %v2044 = vadd.f32 %v1931, %v2043
    %v2045 = vpop.f32.mrb[0].mxu0
    %v2046 = vadd.f32 %v1933, %v2045
    %v2047 = vpop.f32.mrb[0].mxu0
    %v2048 = vadd.f32 %v1935, %v2047
    %2049 = vmatprep.mubr.bf16.mxu0 %v170
    %2050 = vmatmul.mubr.bf16.gmra.mrb[0].mxu0 %v169
    %v2051 = vpop.f32.mrb[0].mxu0
    %v2052 = vadd.f32 %v1939, %v2051
    %v2053 = vpop.f32.mrb[0].mxu0
    %v2054 = vadd.f32 %v1941, %v2053
    %v2055 = vpop.f32.mrb[0].mxu0
    %v2056 = vadd.f32 %v1943, %v2055
    %v2057 = vpop.f32.mrb[0].mxu0
    %v2058 = vadd.f32 %v1945, %v2057
    %2059 = vmatprep.mubr.bf16.mxu0 %v177
    %2060 = vmatmul.mubr.bf16.gmra.mrb[0].mxu0 %v176
    %v2061 = vpop.f32.mrb[0].mxu0
    %v2062 = vadd.f32 %v1949, %v2061
    %v2063 = vpop.f32.mrb[0].mxu0
    %v2064 = vadd.f32 %v1951, %v2063
    %v2065 = vpop.f32.mrb[0].mxu0
    %v2066 = vadd.f32 %v1953, %v2065
    %v2067 = vpop.f32.mrb[0].mxu0
    %v2068 = vadd.f32 %v1955, %v2067
    %2069 = vmatprep.mubr.bf16.mxu0 %v184
    %2070 = vmatmul.mubr.bf16.gmra.mrb[0].mxu0 %v183
    %v2071 = vpop.f32.mrb[0].mxu0
    %v2072 = vadd.f32 %v1959, %v2071
    %v2073 = vpop.f32.mrb[0].mxu0
    %v2074 = vadd.f32 %v1961, %v2073
    %v2075 = vpop.f32.mrb[0].mxu0
    %v2076 = vadd.f32 %v1963, %v2075
    %v2077 = vpop.f32.mrb[0].mxu0
    %v2078 = vadd.f32 %v1965, %v2077
    %2079 = vmatprep.mubr.bf16.mxu0 %v191
    %2080 = vmatmul.mubr.bf16.gmra.mrb[0].mxu0 %v190
    %v2081 = vpop.f32.mrb[0].mxu0
    %v2082 = vadd.f32 %v1969, %v2081
    %v2083 = vpop.f32.mrb[0].mxu0
    %v2084 = vadd.f32 %v1971, %v2083
    %v2085 = vpop.f32.mrb[0].mxu0
    %v2086 = vadd.f32 %v1973, %v2085
    %v2087 = vpop.f32.mrb[0].mxu0
    %v2088 = vadd.f32 %v1975, %v2087
    %2089 = vmatprep.mubr.bf16.mxu0 %v198
    %2090 = vmatmul.mubr.bf16.gmra.mrb[0].mxu0 %v197
    %v2091 = vpop.f32.mrb[0].mxu0
    %v2092 = vadd.f32 %v1979, %v2091
    %v2093 = vpop.f32.mrb[0].mxu0
    %v2094 = vadd.f32 %v1981, %v2093
    %v2095 = vpop.f32.mrb[0].mxu0
    %v2096 = vadd.f32 %v1983, %v2095
    %v2097 = vpop.f32.mrb[0].mxu0
    %v2098 = vadd.f32 %v1985, %v2097
    %2099 = vmatprep.mubr.bf16.mxu0 %v205
    %2100 = vmatmul.mubr.bf16.gmra.mrb[0].mxu0 %v204
    %v2101 = vpop.f32.mrb[0].mxu0
    %v2102 = vadd.f32 %v1989, %v2101
    %v2103 = vpop.f32.mrb[0].mxu0
    %v2104 = vadd.f32 %v1991, %v2103
    %v2105 = vpop.f32.mrb[0].mxu0
    %v2106 = vadd.f32 %v1993, %v2105
    %v2107 = vpop.f32.mrb[0].mxu0
    %v2108 = vadd.f32 %v1995, %v2107
    %2109 = vdwg.mxu0
    %2110 = vmatprep.subr.bf16.mxu0 %v1146
    %2111 = vmatpush1.bf16.msra.mxu0 %v1145
    %2112 = vmatprep.subr.bf16.mxu0 %v1150
    %2113 = vmatpush1.bf16.msra.mxu0 %v1149
    %2114 = vmatprep.subr.bf16.mxu0 %v1154
    %2115 = vmatpush1.bf16.msra.mxu0 %v1153
    %2116 = vmatprep.subr.bf16.mxu0 %v1158
    %2117 = vmatpush1.bf16.msra.mxu0 %v1157
    %2118 = vmatprep.subr.bf16.mxu0 %v1162
    %2119 = vmatpush1.bf16.msra.mxu0 %v1161
    %2120 = vmatprep.subr.bf16.mxu0 %v1166
    %2121 = vmatpush1.bf16.msra.mxu0 %v1165
    %2122 = vmatprep.subr.bf16.mxu0 %v1170
    %2123 = vmatpush1.bf16.msra.mxu0 %v1169
    %2124 = vmatprep.subr.bf16.mxu0 %v1174
    %2125 = vmatpush1.bf16.msra.mxu0 %v1173
    %2126 = vmatprep.subr.bf16.mxu0 %v1178
    %2127 = vmatpush1.bf16.msra.mxu0 %v1177
    %2128 = vmatprep.subr.bf16.mxu0 %v1182
    %2129 = vmatpush1.bf16.msra.mxu0 %v1181
    %2130 = vmatprep.subr.bf16.mxu0 %v1186
    %2131 = vmatpush1.bf16.msra.mxu0 %v1185
    %2132 = vmatprep.subr.bf16.mxu0 %v1190
    %2133 = vmatpush1.bf16.msra.mxu0 %v1189
    %2134 = vmatprep.subr.bf16.mxu0 %v1194
    %2135 = vmatpush1.bf16.msra.mxu0 %v1193
    %2136 = vmatprep.subr.bf16.mxu0 %v1198
    %2137 = vmatpush1.bf16.msra.mxu0 %v1197
    %2138 = vmatprep.subr.bf16.mxu0 %v1202
    %2139 = vmatpush1.bf16.msra.mxu0 %v1201
    %2140 = vmatprep.subr.bf16.mxu0 %v1206
    %2141 = vmatpush1.bf16.msra.mxu0 %v1205
    %2142 = vmatprep.mubr.bf16.mxu0 %v158
    %2143 = vmatmul.mubr.bf16.gmra.mrb[0].mxu0 %v157
    %v2144 = vpop.f32.mrb[0].mxu0
    %v2145 = vadd.f32 %v2032, %v2144
    %v2146 = vpop.f32.mrb[0].mxu0
    %v2147 = vadd.f32 %v2034, %v2146
    %v2148 = vpop.f32.mrb[0].mxu0
    %v2149 = vadd.f32 %v2036, %v2148
    %v2150 = vpop.f32.mrb[0].mxu0
    %v2151 = vadd.f32 %v2038, %v2150
    %2152 = vmatprep.mubr.bf16.mxu0 %v165
    %2153 = vmatmul.mubr.bf16.gmra.mrb[0].mxu0 %v164
    %v2154 = vpop.f32.mrb[0].mxu0
    %v2155 = vadd.f32 %v2042, %v2154
    %v2156 = vpop.f32.mrb[0].mxu0
    %v2157 = vadd.f32 %v2044, %v2156
    %v2158 = vpop.f32.mrb[0].mxu0
    %v2159 = vadd.f32 %v2046, %v2158
    %v2160 = vpop.f32.mrb[0].mxu0
    %v2161 = vadd.f32 %v2048, %v2160
    %2162 = vmatprep.mubr.bf16.mxu0 %v172
    %2163 = vmatmul.mubr.bf16.gmra.mrb[0].mxu0 %v171
    %v2164 = vpop.f32.mrb[0].mxu0
    %v2165 = vadd.f32 %v2052, %v2164
    %v2166 = vpop.f32.mrb[0].mxu0
    %v2167 = vadd.f32 %v2054, %v2166
    %v2168 = vpop.f32.mrb[0].mxu0
    %v2169 = vadd.f32 %v2056, %v2168
    %v2170 = vpop.f32.mrb[0].mxu0
    %v2171 = vadd.f32 %v2058, %v2170
    %2172 = vmatprep.mubr.bf16.mxu0 %v179
    %2173 = vmatmul.mubr.bf16.gmra.mrb[0].mxu0 %v178
    %v2174 = vpop.f32.mrb[0].mxu0
    %v2175 = vadd.f32 %v2062, %v2174
    %v2176 = vpop.f32.mrb[0].mxu0
    %v2177 = vadd.f32 %v2064, %v2176
    %v2178 = vpop.f32.mrb[0].mxu0
    %v2179 = vadd.f32 %v2066, %v2178
    %v2180 = vpop.f32.mrb[0].mxu0
    %v2181 = vadd.f32 %v2068, %v2180
    %2182 = vmatprep.mubr.bf16.mxu0 %v186
    %2183 = vmatmul.mubr.bf16.gmra.mrb[0].mxu0 %v185
    %v2184 = vpop.f32.mrb[0].mxu0
    %v2185 = vadd.f32 %v2072, %v2184
    %v2186 = vpop.f32.mrb[0].mxu0
    %v2187 = vadd.f32 %v2074, %v2186
    %v2188 = vpop.f32.mrb[0].mxu0
    %v2189 = vadd.f32 %v2076, %v2188
    %v2190 = vpop.f32.mrb[0].mxu0
    %v2191 = vadd.f32 %v2078, %v2190
    %2192 = vmatprep.mubr.bf16.mxu0 %v193
    %2193 = vmatmul.mubr.bf16.gmra.mrb[0].mxu0 %v192
    %v2194 = vpop.f32.mrb[0].mxu0
    %v2195 = vadd.f32 %v2082, %v2194
    %v2196 = vpop.f32.mrb[0].mxu0
    %v2197 = vadd.f32 %v2084, %v2196
    %v2198 = vpop.f32.mrb[0].mxu0
    %v2199 = vadd.f32 %v2086, %v2198
    %v2200 = vpop.f32.mrb[0].mxu0
    %v2201 = vadd.f32 %v2088, %v2200
    %2202 = vmatprep.mubr.bf16.mxu0 %v200
    %2203 = vmatmul.mubr.bf16.gmra.mrb[0].mxu0 %v199
    %v2204 = vpop.f32.mrb[0].mxu0
    %v2205 = vadd.f32 %v2092, %v2204
    %v2206 = vpop.f32.mrb[0].mxu0
    %v2207 = vadd.f32 %v2094, %v2206
    %v2208 = vpop.f32.mrb[0].mxu0
    %v2209 = vadd.f32 %v2096, %v2208
    %v2210 = vpop.f32.mrb[0].mxu0
    %v2211 = vadd.f32 %v2098, %v2210
    %2212 = vmatprep.mubr.bf16.mxu0 %v207
    %2213 = vmatmul.mubr.bf16.gmra.mrb[0].mxu0 %v206
    %v2214 = vpop.f32.mrb[0].mxu0
    %v2215 = vadd.f32 %v2102, %v2214
    %v2216 = vpop.f32.mrb[0].mxu0
    %v2217 = vadd.f32 %v2104, %v2216
    %v2218 = vpop.f32.mrb[0].mxu0
    %v2219 = vadd.f32 %v2106, %v2218
    %v2220 = vpop.f32.mrb[0].mxu0
    %v2221 = vadd.f32 %v2108, %v2220
    %2222 = vdwg.mxu0
    %2223 = vmatprep.subr.bf16.mxu0 %v1210
    %2224 = vmatpush1.bf16.msra.mxu0 %v1209
    %2225 = vmatprep.subr.bf16.mxu0 0
    %2226 = vmatpush1.bf16.msra.mxu0 0
    %2227 = vmatprep.subr.bf16.mxu0 0
    %2228 = vmatpush1.bf16.msra.mxu0 0
    %2229 = vmatprep.subr.bf16.mxu0 0
    %2230 = vmatpush1.bf16.msra.mxu0 0
    %2231 = vmatprep.subr.bf16.mxu0 0
    %2232 = vmatpush1.bf16.msra.mxu0 0
    %2233 = vmatprep.subr.bf16.mxu0 0
    %2234 = vmatpush1.bf16.msra.mxu0 0
    %2235 = vmatprep.subr.bf16.mxu0 0
    %2236 = vmatpush1.bf16.msra.mxu0 0
    %2237 = vmatprep.subr.bf16.mxu0 0
    %2238 = vmatpush1.bf16.msra.mxu0 0
    %2239 = vmatprep.subr.bf16.mxu0 0
    %2240 = vmatpush1.bf16.msra.mxu0 0
    %2241 = vmatprep.subr.bf16.mxu0 0
    %2242 = vmatpush1.bf16.msra.mxu0 0
    %2243 = vmatprep.subr.bf16.mxu0 0
    %2244 = vmatpush1.bf16.msra.mxu0 0
    %2245 = vmatprep.subr.bf16.mxu0 0
    %2246 = vmatpush1.bf16.msra.mxu0 0
    %2247 = vmatprep.subr.bf16.mxu0 0
    %2248 = vmatpush1.bf16.msra.mxu0 0
    %2249 = vmatprep.subr.bf16.mxu0 0
    %2250 = vmatpush1.bf16.msra.mxu0 0
    %2251 = vmatprep.subr.bf16.mxu0 0
    %2252 = vmatpush1.bf16.msra.mxu0 0
    %2253 = vmatprep.subr.bf16.mxu0 0
    %2254 = vmatpush1.bf16.msra.mxu0 0
    %2255 = vmatprep.mubr.bf16.mxu0 0
    %2256 = vmatmul.mubr.bf16.gmra.mrb[0].mxu0 %v1409
    %v2257 = vpop.f32.mrb[0].mxu0
    %v2258 = vadd.f32 %v2145, %v2257
    %v2259 = vpop.f32.mrb[0].mxu0
    %v2260 = vadd.f32 %v2147, %v2259
    %v2261 = vpop.f32.mrb[0].mxu0
    %v2262 = vadd.f32 %v2149, %v2261
    %v2263 = vpop.f32.mrb[0].mxu0
    %v2264 = vadd.f32 %v2151, %v2263
    %2265 = vmatprep.mubr.bf16.mxu0 0
    %2266 = vmatmul.mubr.bf16.gmra.mrb[0].mxu0 %v1412
    %v2267 = vpop.f32.mrb[0].mxu0
    %v2268 = vadd.f32 %v2155, %v2267
    %v2269 = vpop.f32.mrb[0].mxu0
    %v2270 = vadd.f32 %v2157, %v2269
    %v2271 = vpop.f32.mrb[0].mxu0
    %v2272 = vadd.f32 %v2159, %v2271
    %v2273 = vpop.f32.mrb[0].mxu0
    %v2274 = vadd.f32 %v2161, %v2273
    %2275 = vmatprep.mubr.bf16.mxu0 0
    %2276 = vmatmul.mubr.bf16.gmra.mrb[0].mxu0 %v1415
    %v2277 = vpop.f32.mrb[0].mxu0
    %v2278 = vadd.f32 %v2165, %v2277
    %v2279 = vpop.f32.mrb[0].mxu0
    %v2280 = vadd.f32 %v2167, %v2279
    %v2281 = vpop.f32.mrb[0].mxu0
    %v2282 = vadd.f32 %v2169, %v2281
    %v2283 = vpop.f32.mrb[0].mxu0
    %v2284 = vadd.f32 %v2171, %v2283
    %2285 = vmatprep.mubr.bf16.mxu0 0
    %2286 = vmatmul.mubr.bf16.gmra.mrb[0].mxu0 %v1418
    %v2287 = vpop.f32.mrb[0].mxu0
    %v2288 = vadd.f32 %v2175, %v2287
    %v2289 = vpop.f32.mrb[0].mxu0
    %v2290 = vadd.f32 %v2177, %v2289
    %v2291 = vpop.f32.mrb[0].mxu0
    %v2292 = vadd.f32 %v2179, %v2291
    %v2293 = vpop.f32.mrb[0].mxu0
    %v2294 = vadd.f32 %v2181, %v2293
    %2295 = vmatprep.mubr.bf16.mxu0 0
    %2296 = vmatmul.mubr.bf16.gmra.mrb[0].mxu0 %v1421
    %v2297 = vpop.f32.mrb[0].mxu0
    %v2298 = vadd.f32 %v2185, %v2297
    %v2299 = vpop.f32.mrb[0].mxu0
    %v2300 = vadd.f32 %v2187, %v2299
    %v2301 = vpop.f32.mrb[0].mxu0
    %v2302 = vadd.f32 %v2189, %v2301
    %v2303 = vpop.f32.mrb[0].mxu0
    %v2304 = vadd.f32 %v2191, %v2303
    %2305 = vmatprep.mubr.bf16.mxu0 0
    %2306 = vmatmul.mubr.bf16.gmra.mrb[0].mxu0 %v1424
    %v2307 = vpop.f32.mrb[0].mxu0
    %v2308 = vadd.f32 %v2195, %v2307
    %v2309 = vpop.f32.mrb[0].mxu0
    %v2310 = vadd.f32 %v2197, %v2309
    %v2311 = vpop.f32.mrb[0].mxu0
    %v2312 = vadd.f32 %v2199, %v2311
    %v2313 = vpop.f32.mrb[0].mxu0
    %v2314 = vadd.f32 %v2201, %v2313
    %2315 = vmatprep.mubr.bf16.mxu0 0
    %2316 = vmatmul.mubr.bf16.gmra.mrb[0].mxu0 %v1427
    %v2317 = vpop.f32.mrb[0].mxu0
    %v2318 = vadd.f32 %v2205, %v2317
    %v2319 = vpop.f32.mrb[0].mxu0
    %v2320 = vadd.f32 %v2207, %v2319
    %v2321 = vpop.f32.mrb[0].mxu0
    %v2322 = vadd.f32 %v2209, %v2321
    %v2323 = vpop.f32.mrb[0].mxu0
    %v2324 = vadd.f32 %v2211, %v2323
    %2325 = vmatprep.mubr.bf16.mxu0 0
    %2326 = vmatmul.mubr.bf16.gmra.mrb[0].mxu0 %v1430
    %v2327 = vpop.f32.mrb[0].mxu0
    %v2328 = vadd.f32 %v2215, %v2327
    %v2329 = vpop.f32.mrb[0].mxu0
    %v2330 = vadd.f32 %v2217, %v2329
    %v2331 = vpop.f32.mrb[0].mxu0
    %v2332 = vadd.f32 %v2219, %v2331
    %v2333 = vpop.f32.mrb[0].mxu0
    %v2334 = vadd.f32 %v2221, %v2333
    %2335 = vdwg.mxu0
    %v2336 = vmax.f32 %v1806, 0.0
    %v2337 = vmax.f32 %v1808, 0.0
    %v2338 = vmax.f32 %v2258, 0.0
    %v2339 = vmax.f32 %v2260, 0.0
    %v2340 = vmax.f32 %v1810, 0.0
    %v2341 = vmax.f32 %v1812, 0.0
    %v2342 = vmax.f32 %v2262, 0.0
    %v2343 = vmax.f32 %v2264, 0.0
    %v2344 = vmax.f32 %v1816, 0.0
    %v2345 = vmax.f32 %v1818, 0.0
    %v2346 = vmax.f32 %v2268, 0.0
    %v2347 = vmax.f32 %v2270, 0.0
    %v2348 = vmax.f32 %v1820, 0.0
    %v2349 = vmax.f32 %v1822, 0.0
    %v2350 = vmax.f32 %v2272, 0.0
    %v2351 = vmax.f32 %v2274, 0.0
    %v2352 = vmax.f32 %v1826, 0.0
    %v2353 = vmax.f32 %v1828, 0.0
    %v2354 = vmax.f32 %v2278, 0.0
    %v2355 = vmax.f32 %v2280, 0.0
    %v2356 = vmax.f32 %v1830, 0.0
    %v2357 = vmax.f32 %v1832, 0.0
    %v2358 = vmax.f32 %v2282, 0.0
    %v2359 = vmax.f32 %v2284, 0.0
    %v2360 = vmax.f32 %v1836, 0.0
    %v2361 = vmax.f32 %v1838, 0.0
    %v2362 = vmax.f32 %v2288, 0.0
    %v2363 = vmax.f32 %v2290, 0.0
    %v2364 = vmax.f32 %v1840, 0.0
    %v2365 = vmax.f32 %v1842, 0.0
    %v2366 = vmax.f32 %v2292, 0.0
    %v2367 = vmax.f32 %v2294, 0.0
    %v2368 = vmax.f32 %v1846, 0.0
    %v2369 = vmax.f32 %v1848, 0.0
    %v2370 = vmax.f32 %v2298, 0.0
    %v2371 = vmax.f32 %v2300, 0.0
    %v2372 = vmax.f32 %v1850, 0.0
    %v2373 = vmax.f32 %v1852, 0.0
    %v2374 = vmax.f32 %v2302, 0.0
    %v2375 = vmax.f32 %v2304, 0.0
    %v2376 = vmax.f32 %v1856, 0.0
    %v2377 = vmax.f32 %v1858, 0.0
    %v2378 = vmax.f32 %v2308, 0.0
    %v2379 = vmax.f32 %v2310, 0.0
    %v2380 = vmax.f32 %v1860, 0.0
    %v2381 = vmax.f32 %v1862, 0.0
    %v2382 = vmax.f32 %v2312, 0.0
    %v2383 = vmax.f32 %v2314, 0.0
    %v2384 = vmax.f32 %v1866, 0.0
    %v2385 = vmax.f32 %v1868, 0.0
    %v2386 = vmax.f32 %v2318, 0.0
    %v2387 = vmax.f32 %v2320, 0.0
    %v2388 = vmax.f32 %v1870, 0.0
    %v2389 = vmax.f32 %v1872, 0.0
    %v2390 = vmax.f32 %v2322, 0.0
    %v2391 = vmax.f32 %v2324, 0.0
    %v2392 = vmax.f32 %v1876, 0.0
    %v2393 = vmax.f32 %v1878, 0.0
    %v2394 = vmax.f32 %v2328, 0.0
    %v2395 = vmax.f32 %v2330, 0.0
    %v2396 = vmax.f32 %v1880, 0.0
    %v2397 = vmax.f32 %v1882, 0.0
    %v2398 = vmax.f32 %v2332, 0.0
    %v2399 = vmax.f32 %v2334, 0.0
    %v2400 = vpack.c.bf16 %v2340, %v2336
    %v2401 = vpack.c.bf16 %v2341, %v2337
    %v2402 = vpack.c.bf16 %v2342, %v2338
    %v2403 = vpack.c.bf16 %v2343, %v2339
    %v2404 = vpack.c.bf16 %v2348, %v2344
    %v2405 = vpack.c.bf16 %v2349, %v2345
    %v2406 = vpack.c.bf16 %v2350, %v2346
    %v2407 = vpack.c.bf16 %v2351, %v2347
    %v2408 = vpack.c.bf16 %v2356, %v2352
    %v2409 = vpack.c.bf16 %v2357, %v2353
    %v2410 = vpack.c.bf16 %v2358, %v2354
    %v2411 = vpack.c.bf16 %v2359, %v2355
    %v2412 = vpack.c.bf16 %v2364, %v2360
    %v2413 = vpack.c.bf16 %v2365, %v2361
    %v2414 = vpack.c.bf16 %v2366, %v2362
    %v2415 = vpack.c.bf16 %v2367, %v2363
    %v2416 = vpack.c.bf16 %v2372, %v2368
    %v2417 = vpack.c.bf16 %v2373, %v2369
    %v2418 = vpack.c.bf16 %v2374, %v2370
    %v2419 = vpack.c.bf16 %v2375, %v2371
    %v2420 = vpack.c.bf16 %v2380, %v2376
    %v2421 = vpack.c.bf16 %v2381, %v2377
    %v2422 = vpack.c.bf16 %v2382, %v2378
    %v2423 = vpack.c.bf16 %v2383, %v2379
    %v2424 = vpack.c.bf16 %v2388, %v2384
    %v2425 = vpack.c.bf16 %v2389, %v2385
    %v2426 = vpack.c.bf16 %v2390, %v2386
    %v2427 = vpack.c.bf16 %v2391, %v2387
    %v2428 = vpack.c.bf16 %v2396, %v2392
    %v2429 = vpack.c.bf16 %v2397, %v2393
    %v2430 = vpack.c.bf16 %v2398, %v2394
    %v2431 = vpack.c.bf16 %v2399, %v2395
    %v2432 = vld [vmem:[%s3] sm:$0xff]
    %v2433 = vld [vmem:[%s3 + $0x8] sm:$0xff]
    %v2434 = vld [vmem:[%s3 + $0x10] sm:$0xff]
    %v2435 = vld [vmem:[%s3 + $0x18] sm:$0xff]
    %v2436 = vld [vmem:[%s3 + $0x20] sm:$0xff]
    %v2437 = vld [vmem:[%s3 + $0x28] sm:$0xff]
    %v2438 = vld [vmem:[%s3 + $0x30] sm:$0xff]
    %v2439 = vld [vmem:[%s3 + $0x38] sm:$0xff]
    %v2440 = vld [vmem:[%s3 + $0x40] sm:$0xff]
    %v2441 = vld [vmem:[%s3 + $0x48] sm:$0xff]
    %v2442 = vld [vmem:[%s3 + $0x50] sm:$0xff]
    %v2443 = vld [vmem:[%s3 + $0x58] sm:$0xff]
    %v2444 = vld [vmem:[%s3 + $0x60] sm:$0xff]
    %v2445 = vld [vmem:[%s3 + $0x68] sm:$0xff]
    %v2446 = vld [vmem:[%s3 + $0x70] sm:$0xff]
    %v2447 = vld [vmem:[%s3 + $0x78] sm:$0xff]
    %v2448 = vld [vmem:[%s3 + $0x80] sm:$0xff]
    %v2449 = vld [vmem:[%s3 + $0x88] sm:$0xff]
    %v2450 = vld [vmem:[%s3 + $0x90] sm:$0xff]
    %v2451 = vld [vmem:[%s3 + $0x98] sm:$0xff]
    %v2452 = vld [vmem:[%s3 + $0xa0] sm:$0xff]
    %v2453 = vld [vmem:[%s3 + $0xa8] sm:$0xff]
    %v2454 = vld [vmem:[%s3 + $0xb0] sm:$0xff]
    %v2455 = vld [vmem:[%s3 + $0xb8] sm:$0xff]
    %v2456 = vld [vmem:[%s3 + $0xc0] sm:$0xff]
    %v2457 = vld [vmem:[%s3 + $0xc8] sm:$0xff]
    %v2458 = vld [vmem:[%s3 + $0xd0] sm:$0xff]
    %v2459 = vld [vmem:[%s3 + $0xd8] sm:$0xff]
    %v2460 = vld [vmem:[%s3 + $0xe0] sm:$0xff]
    %v2461 = vld [vmem:[%s3 + $0xe8] sm:$0xff]
    %v2462 = vld [vmem:[%s3 + $0xf0] sm:$0xff]
    %v2463 = vld [vmem:[%s3 + $0xf8] sm:$0xff]
    %v2464 = vld [vmem:[%s3 + $0x100] sm:$0xff]
    %v2465 = vld [vmem:[%s3 + $0x108] sm:$0xff]
    %v2466 = vld [vmem:[%s3 + $0x110] sm:$0xff]
    %v2467 = vld [vmem:[%s3 + $0x118] sm:$0xff]
    %v2468 = vld [vmem:[%s3 + $0x120] sm:$0xff]
    %v2469 = vld [vmem:[%s3 + $0x128] sm:$0xff]
    %v2470 = vld [vmem:[%s3 + $0x130] sm:$0xff]
    %v2471 = vld [vmem:[%s3 + $0x138] sm:$0xff]
    %v2472 = vld [vmem:[%s3 + $0x140] sm:$0xff]
    %v2473 = vld [vmem:[%s3 + $0x148] sm:$0xff]
    %v2474 = vld [vmem:[%s3 + $0x150] sm:$0xff]
    %v2475 = vld [vmem:[%s3 + $0x158] sm:$0xff]
    %v2476 = vld [vmem:[%s3 + $0x160] sm:$0xff]
    %v2477 = vld [vmem:[%s3 + $0x168] sm:$0xff]
    %v2478 = vld [vmem:[%s3 + $0x170] sm:$0xff]
    %v2479 = vld [vmem:[%s3 + $0x178] sm:$0xff]
    %v2480 = vld [vmem:[%s3 + $0x180] sm:$0xff]
    %v2481 = vld [vmem:[%s3 + $0x188] sm:$0xff]
    %v2482 = vld [vmem:[%s3 + $0x190] sm:$0xff]
    %v2483 = vld [vmem:[%s3 + $0x198] sm:$0xff]
    %v2484 = vld [vmem:[%s3 + $0x1a0] sm:$0xff]
    %v2485 = vld [vmem:[%s3 + $0x1a8] sm:$0xff]
    %v2486 = vld [vmem:[%s3 + $0x1b0] sm:$0xff]
    %v2487 = vld [vmem:[%s3 + $0x1b8] sm:$0xff]
    %v2488 = vld [vmem:[%s3 + $0x1c0] sm:$0xff]
    %v2489 = vld [vmem:[%s3 + $0x1c8] sm:$0xff]
    %v2490 = vld [vmem:[%s3 + $0x1d0] sm:$0xff]
    %v2491 = vld [vmem:[%s3 + $0x1d8] sm:$0xff]
    %v2492 = vld [vmem:[%s3 + $0x1e0] sm:$0xff]
    %v2493 = vld [vmem:[%s3 + $0x1e8] sm:$0xff]
    %v2494 = vld [vmem:[%s3 + $0x1f0] sm:$0xff]
    %v2495 = vld [vmem:[%s3 + $0x1f8] sm:$0xff]
    %v2496 = vld [vmem:[%s4] sm:$0x3]
    %v2498 = vlaneseq
    %v2499 = vshrl.u32 %v2498, 7
    %v2500 = vsub.s32 0, %v2499
    %v2501 = vrot.slane %v2496, %v2500
    %v2502 = vlaneseq
    %v2503 = vshrl.u32 %v2502, 7
    %v2504 = vsub.s32 1, %v2503
    %v2505 = vrot.slane %v2496, %v2504
    %v2572 = vunpack.c.l.b16 %v2432
    %v2573 = vunpack.c.h.b16 %v2432
    %v2574 = vunpack.c.l.b16 %v2433
    %v2575 = vunpack.c.h.b16 %v2433
    %v2576 = vunpack.c.l.b16 %v2434
    %v2577 = vunpack.c.h.b16 %v2434
    %v2578 = vunpack.c.l.b16 %v2435
    %v2579 = vunpack.c.h.b16 %v2435
    %v2580 = vunpack.c.l.b16 %v2436
    %v2581 = vunpack.c.h.b16 %v2436
    %v2582 = vunpack.c.l.b16 %v2437
    %v2583 = vunpack.c.h.b16 %v2437
    %v2584 = vunpack.c.l.b16 %v2438
    %v2585 = vunpack.c.h.b16 %v2438
    %v2586 = vunpack.c.l.b16 %v2439
    %v2587 = vunpack.c.h.b16 %v2439
    %v2588 = vunpack.c.l.b16 %v2440
    %v2589 = vunpack.c.h.b16 %v2440
    %v2590 = vunpack.c.l.b16 %v2441
    %v2591 = vunpack.c.h.b16 %v2441
    %v2592 = vunpack.c.l.b16 %v2442
    %v2593 = vunpack.c.h.b16 %v2442
    %v2594 = vunpack.c.l.b16 %v2443
    %v2595 = vunpack.c.h.b16 %v2443
    %v2596 = vunpack.c.l.b16 %v2444
    %v2597 = vunpack.c.h.b16 %v2444
    %v2598 = vunpack.c.l.b16 %v2445
    %v2599 = vunpack.c.h.b16 %v2445
    %v2600 = vunpack.c.l.b16 %v2446
    %v2601 = vunpack.c.h.b16 %v2446
    %v2602 = vunpack.c.l.b16 %v2447
    %v2603 = vunpack.c.h.b16 %v2447
    %v2604 = vunpack.c.l.b16 %v2448
    %v2605 = vunpack.c.h.b16 %v2448
    %v2606 = vunpack.c.l.b16 %v2449
    %v2607 = vunpack.c.h.b16 %v2449
    %v2608 = vunpack.c.l.b16 %v2450
    %v2609 = vunpack.c.h.b16 %v2450
    %v2610 = vunpack.c.l.b16 %v2451
    %v2611 = vunpack.c.h.b16 %v2451
    %v2612 = vunpack.c.l.b16 %v2452
    %v2613 = vunpack.c.h.b16 %v2452
    %v2614 = vunpack.c.l.b16 %v2453
    %v2615 = vunpack.c.h.b16 %v2453
    %v2616 = vunpack.c.l.b16 %v2454
    %v2617 = vunpack.c.h.b16 %v2454
    %v2618 = vunpack.c.l.b16 %v2455
    %v2619 = vunpack.c.h.b16 %v2455
    %v2620 = vunpack.c.l.b16 %v2456
    %v2621 = vunpack.c.h.b16 %v2456
    %v2622 = vunpack.c.l.b16 %v2457
    %v2623 = vunpack.c.h.b16 %v2457
    %v2624 = vunpack.c.l.b16 %v2458
    %v2625 = vunpack.c.h.b16 %v2458
    %v2626 = vunpack.c.l.b16 %v2459
    %v2627 = vunpack.c.h.b16 %v2459
    %v2628 = vunpack.c.l.b16 %v2460
    %v2629 = vunpack.c.h.b16 %v2460
    %v2630 = vunpack.c.l.b16 %v2461
    %v2631 = vunpack.c.h.b16 %v2461
    %v2632 = vunpack.c.l.b16 %v2462
    %v2633 = vunpack.c.h.b16 %v2462
    %v2634 = vunpack.c.l.b16 %v2463
    %v2635 = vunpack.c.h.b16 %v2463
    %v2636 = vunpack.c.l.b16 %v2464
    %v2637 = vunpack.c.h.b16 %v2464
    %v2638 = vunpack.c.l.b16 %v2465
    %v2639 = vunpack.c.h.b16 %v2465
    %v2640 = vunpack.c.l.b16 %v2466
    %v2641 = vunpack.c.h.b16 %v2466
    %v2642 = vunpack.c.l.b16 %v2467
    %v2643 = vunpack.c.h.b16 %v2467
    %v2644 = vunpack.c.l.b16 %v2468
    %v2645 = vunpack.c.h.b16 %v2468
    %v2646 = vunpack.c.l.b16 %v2469
    %v2647 = vunpack.c.h.b16 %v2469
    %v2648 = vunpack.c.l.b16 %v2470
    %v2649 = vunpack.c.h.b16 %v2470
    %v2650 = vunpack.c.l.b16 %v2471
    %v2651 = vunpack.c.h.b16 %v2471
    %v2652 = vunpack.c.l.b16 %v2472
    %v2653 = vunpack.c.h.b16 %v2472
    %v2654 = vunpack.c.l.b16 %v2473
    %v2655 = vunpack.c.h.b16 %v2473
    %v2656 = vunpack.c.l.b16 %v2474
    %v2657 = vunpack.c.h.b16 %v2474
    %v2658 = vunpack.c.l.b16 %v2475
    %v2659 = vunpack.c.h.b16 %v2475
    %v2660 = vunpack.c.l.b16 %v2476
    %v2661 = vunpack.c.h.b16 %v2476
    %v2662 = vunpack.c.l.b16 %v2477
    %v2663 = vunpack.c.h.b16 %v2477
    %v2664 = vunpack.c.l.b16 %v2478
    %v2665 = vunpack.c.h.b16 %v2478
    %v2666 = vunpack.c.l.b16 %v2479
    %v2667 = vunpack.c.h.b16 %v2479
    %v2668 = vunpack.c.l.b16 %v2480
    %v2669 = vunpack.c.h.b16 %v2480
    %v2670 = vunpack.c.l.b16 %v2481
    %v2671 = vunpack.c.h.b16 %v2481
    %v2672 = vunpack.c.l.b16 %v2482
    %v2673 = vunpack.c.h.b16 %v2482
    %v2674 = vunpack.c.l.b16 %v2483
    %v2675 = vunpack.c.h.b16 %v2483
    %v2676 = vunpack.c.l.b16 %v2484
    %v2677 = vunpack.c.h.b16 %v2484
    %v2678 = vunpack.c.l.b16 %v2485
    %v2679 = vunpack.c.h.b16 %v2485
    %v2680 = vunpack.c.l.b16 %v2486
    %v2681 = vunpack.c.h.b16 %v2486
    %v2682 = vunpack.c.l.b16 %v2487
    %v2683 = vunpack.c.h.b16 %v2487
    %v2684 = vunpack.c.l.b16 %v2488
    %v2685 = vunpack.c.h.b16 %v2488
    %v2686 = vunpack.c.l.b16 %v2489
    %v2687 = vunpack.c.h.b16 %v2489
    %v2688 = vunpack.c.l.b16 %v2490
    %v2689 = vunpack.c.h.b16 %v2490
    %v2690 = vunpack.c.l.b16 %v2491
    %v2691 = vunpack.c.h.b16 %v2491
    %v2692 = vunpack.c.l.b16 %v2492
    %v2693 = vunpack.c.h.b16 %v2492
    %v2694 = vunpack.c.l.b16 %v2493
    %v2695 = vunpack.c.h.b16 %v2493
    %v2696 = vunpack.c.l.b16 %v2494
    %v2697 = vunpack.c.h.b16 %v2494
    %v2698 = vunpack.c.l.b16 %v2495
    %v2699 = vunpack.c.h.b16 %v2495
    %v2700 = vpack.c.b16 %v2574, %v2572
    %v2701 = vpack.c.b16 %v2575, %v2573
    %v2702 = vpack.c.b16 %v2578, %v2576
    %v2703 = vpack.c.b16 %v2579, %v2577
    %v2704 = vpack.c.b16 %v2582, %v2580
    %v2705 = vpack.c.b16 %v2583, %v2581
    %v2706 = vpack.c.b16 %v2586, %v2584
    %v2707 = vpack.c.b16 %v2587, %v2585
    %v2708 = vpack.c.b16 %v2590, %v2588
    %v2709 = vpack.c.b16 %v2591, %v2589
    %v2710 = vpack.c.b16 %v2594, %v2592
    %v2711 = vpack.c.b16 %v2595, %v2593
    %v2712 = vpack.c.b16 %v2598, %v2596
    %v2713 = vpack.c.b16 %v2599, %v2597
    %v2714 = vpack.c.b16 %v2602, %v2600
    %v2715 = vpack.c.b16 %v2603, %v2601
    %v2716 = vpack.c.b16 %v2606, %v2604
    %v2717 = vpack.c.b16 %v2607, %v2605
    %v2718 = vpack.c.b16 %v2610, %v2608
    %v2719 = vpack.c.b16 %v2611, %v2609
    %v2720 = vpack.c.b16 %v2614, %v2612
    %v2721 = vpack.c.b16 %v2615, %v2613
    %v2722 = vpack.c.b16 %v2618, %v2616
    %v2723 = vpack.c.b16 %v2619, %v2617
    %v2724 = vpack.c.b16 %v2622, %v2620
    %v2725 = vpack.c.b16 %v2623, %v2621
    %v2726 = vpack.c.b16 %v2626, %v2624
    %v2727 = vpack.c.b16 %v2627, %v2625
    %v2728 = vpack.c.b16 %v2630, %v2628
    %v2729 = vpack.c.b16 %v2631, %v2629
    %v2730 = vpack.c.b16 %v2634, %v2632
    %v2731 = vpack.c.b16 %v2635, %v2633
    %v2732 = vpack.c.b16 %v2638, %v2636
    %v2733 = vpack.c.b16 %v2639, %v2637
    %v2734 = vpack.c.b16 %v2642, %v2640
    %v2735 = vpack.c.b16 %v2643, %v2641
    %v2736 = vpack.c.b16 %v2646, %v2644
    %v2737 = vpack.c.b16 %v2647, %v2645
    %v2738 = vpack.c.b16 %v2650, %v2648
    %v2739 = vpack.c.b16 %v2651, %v2649
    %v2740 = vpack.c.b16 %v2654, %v2652
    %v2741 = vpack.c.b16 %v2655, %v2653
    %v2742 = vpack.c.b16 %v2658, %v2656
    %v2743 = vpack.c.b16 %v2659, %v2657
    %v2744 = vpack.c.b16 %v2662, %v2660
    %v2745 = vpack.c.b16 %v2663, %v2661
    %v2746 = vpack.c.b16 %v2666, %v2664
    %v2747 = vpack.c.b16 %v2667, %v2665
    %v2748 = vpack.c.b16 %v2670, %v2668
    %v2749 = vpack.c.b16 %v2671, %v2669
    %v2750 = vpack.c.b16 %v2674, %v2672
    %v2751 = vpack.c.b16 %v2675, %v2673
    %v2752 = vpack.c.b16 %v2678, %v2676
    %v2753 = vpack.c.b16 %v2679, %v2677
    %v2754 = vpack.c.b16 %v2682, %v2680
    %v2755 = vpack.c.b16 %v2683, %v2681
    %v2756 = vpack.c.b16 %v2686, %v2684
    %v2757 = vpack.c.b16 %v2687, %v2685
    %v2758 = vpack.c.b16 %v2690, %v2688
    %v2759 = vpack.c.b16 %v2691, %v2689
    %v2760 = vpack.c.b16 %v2694, %v2692
    %v2761 = vpack.c.b16 %v2695, %v2693
    %v2762 = vpack.c.b16 %v2698, %v2696
    %v2763 = vpack.c.b16 %v2699, %v2697
    %2828 = vmatprep.subr.bf16.mxu0 %v2701
    %2829 = vmatpush1.bf16.msra.mxu0 %v2700
    %2830 = vmatprep.subr.bf16.mxu0 %v2703
    %2831 = vmatpush1.bf16.msra.mxu0 %v2702
    %2832 = vmatprep.subr.bf16.mxu0 %v2705
    %2833 = vmatpush1.bf16.msra.mxu0 %v2704
    %2834 = vmatprep.subr.bf16.mxu0 %v2707
    %2835 = vmatpush1.bf16.msra.mxu0 %v2706
    %2836 = vmatprep.subr.bf16.mxu0 %v2709
    %2837 = vmatpush1.bf16.msra.mxu0 %v2708
    %2838 = vmatprep.subr.bf16.mxu0 %v2711
    %2839 = vmatpush1.bf16.msra.mxu0 %v2710
    %2840 = vmatprep.subr.bf16.mxu0 %v2713
    %2841 = vmatpush1.bf16.msra.mxu0 %v2712
    %2842 = vmatprep.subr.bf16.mxu0 %v2715
    %2843 = vmatpush1.bf16.msra.mxu0 %v2714
    %2844 = vmatprep.subr.bf16.mxu0 %v2717
    %2845 = vmatpush1.bf16.msra.mxu0 %v2716
    %2846 = vmatprep.subr.bf16.mxu0 %v2719
    %2847 = vmatpush1.bf16.msra.mxu0 %v2718
    %2848 = vmatprep.subr.bf16.mxu0 %v2721
    %2849 = vmatpush1.bf16.msra.mxu0 %v2720
    %2850 = vmatprep.subr.bf16.mxu0 %v2723
    %2851 = vmatpush1.bf16.msra.mxu0 %v2722
    %2852 = vmatprep.subr.bf16.mxu0 %v2725
    %2853 = vmatpush1.bf16.msra.mxu0 %v2724
    %2854 = vmatprep.subr.bf16.mxu0 %v2727
    %2855 = vmatpush1.bf16.msra.mxu0 %v2726
    %2856 = vmatprep.subr.bf16.mxu0 %v2729
    %2857 = vmatpush1.bf16.msra.mxu0 %v2728
    %2858 = vmatprep.subr.bf16.mxu0 %v2731
    %2859 = vmatpush1.bf16.msra.mxu0 %v2730
    %2860 = vmatprep.mubr.bf16.mxu0 %v2401
    %2861 = vmatmul.mubr.bf16.gmra.mrb[0].mxu0 %v2400
    %v2862 = vpop.f32.mrb[0].mxu0
    %v2863 = vadd.f32 %v2501, %v2862
    %v2864 = vpop.f32.mrb[0].mxu0
    %v2865 = vadd.f32 %v2505, %v2864
    %v2866 = vpop.f32.mrb[0].mxu0
    %v2867 = vadd.f32 %v2501, %v2866
    %v2868 = vpop.f32.mrb[0].mxu0
    %v2869 = vadd.f32 %v2505, %v2868
    %2870 = vmatprep.mubr.bf16.mxu0 %v2405
    %2871 = vmatmul.mubr.bf16.gmra.mrb[0].mxu0 %v2404
    %v2872 = vpop.f32.mrb[0].mxu0
    %v2873 = vadd.f32 %v2501, %v2872
    %v2874 = vpop.f32.mrb[0].mxu0
    %v2875 = vadd.f32 %v2505, %v2874
    %v2876 = vpop.f32.mrb[0].mxu0
    %v2877 = vadd.f32 %v2501, %v2876
    %v2878 = vpop.f32.mrb[0].mxu0
    %v2879 = vadd.f32 %v2505, %v2878
    %2880 = vmatprep.mubr.bf16.mxu0 %v2409
    %2881 = vmatmul.mubr.bf16.gmra.mrb[0].mxu0 %v2408
    %v2882 = vpop.f32.mrb[0].mxu0
    %v2883 = vadd.f32 %v2501, %v2882
    %v2884 = vpop.f32.mrb[0].mxu0
    %v2885 = vadd.f32 %v2505, %v2884
    %v2886 = vpop.f32.mrb[0].mxu0
    %v2887 = vadd.f32 %v2501, %v2886
    %v2888 = vpop.f32.mrb[0].mxu0
    %v2889 = vadd.f32 %v2505, %v2888
    %2890 = vmatprep.mubr.bf16.mxu0 %v2413
    %2891 = vmatmul.mubr.bf16.gmra.mrb[0].mxu0 %v2412
    %v2892 = vpop.f32.mrb[0].mxu0
    %v2893 = vadd.f32 %v2501, %v2892
    %v2894 = vpop.f32.mrb[0].mxu0
    %v2895 = vadd.f32 %v2505, %v2894
    %v2896 = vpop.f32.mrb[0].mxu0
    %v2897 = vadd.f32 %v2501, %v2896
    %v2898 = vpop.f32.mrb[0].mxu0
    %v2899 = vadd.f32 %v2505, %v2898
    %2900 = vmatprep.mubr.bf16.mxu0 %v2417
    %2901 = vmatmul.mubr.bf16.gmra.mrb[0].mxu0 %v2416
    %v2902 = vpop.f32.mrb[0].mxu0
    %v2903 = vadd.f32 %v2501, %v2902
    %v2904 = vpop.f32.mrb[0].mxu0
    %v2905 = vadd.f32 %v2505, %v2904
    %v2906 = vpop.f32.mrb[0].mxu0
    %v2907 = vadd.f32 %v2501, %v2906
    %v2908 = vpop.f32.mrb[0].mxu0
    %v2909 = vadd.f32 %v2505, %v2908
    %2910 = vmatprep.mubr.bf16.mxu0 %v2421
    %2911 = vmatmul.mubr.bf16.gmra.mrb[0].mxu0 %v2420
    %v2912 = vpop.f32.mrb[0].mxu0
    %v2913 = vadd.f32 %v2501, %v2912
    %v2914 = vpop.f32.mrb[0].mxu0
    %v2915 = vadd.f32 %v2505, %v2914
    %v2916 = vpop.f32.mrb[0].mxu0
    %v2917 = vadd.f32 %v2501, %v2916
    %v2918 = vpop.f32.mrb[0].mxu0
    %v2919 = vadd.f32 %v2505, %v2918
    %2920 = vmatprep.mubr.bf16.mxu0 %v2425
    %2921 = vmatmul.mubr.bf16.gmra.mrb[0].mxu0 %v2424
    %v2922 = vpop.f32.mrb[0].mxu0
    %v2923 = vadd.f32 %v2501, %v2922
    %v2924 = vpop.f32.mrb[0].mxu0
    %v2925 = vadd.f32 %v2505, %v2924
    %v2926 = vpop.f32.mrb[0].mxu0
    %v2927 = vadd.f32 %v2501, %v2926
    %v2928 = vpop.f32.mrb[0].mxu0
    %v2929 = vadd.f32 %v2505, %v2928
    %2930 = vmatprep.mubr.bf16.mxu0 %v2429
    %2931 = vmatmul.mubr.bf16.gmra.mrb[0].mxu0 %v2428
    %v2932 = vpop.f32.mrb[0].mxu0
    %v2933 = vadd.f32 %v2501, %v2932
    %v2934 = vpop.f32.mrb[0].mxu0
    %v2935 = vadd.f32 %v2505, %v2934
    %v2936 = vpop.f32.mrb[0].mxu0
    %v2937 = vadd.f32 %v2501, %v2936
    %v2938 = vpop.f32.mrb[0].mxu0
    %v2939 = vadd.f32 %v2505, %v2938
    %2940 = vdwg.mxu0
    %2941 = vmatprep.subr.bf16.mxu0 %v2733
    %2942 = vmatpush1.bf16.msra.mxu0 %v2732
    %2943 = vmatprep.subr.bf16.mxu0 %v2735
    %2944 = vmatpush1.bf16.msra.mxu0 %v2734
    %2945 = vmatprep.subr.bf16.mxu0 %v2737
    %2946 = vmatpush1.bf16.msra.mxu0 %v2736
    %2947 = vmatprep.subr.bf16.mxu0 %v2739
    %2948 = vmatpush1.bf16.msra.mxu0 %v2738
    %2949 = vmatprep.subr.bf16.mxu0 %v2741
    %2950 = vmatpush1.bf16.msra.mxu0 %v2740
    %2951 = vmatprep.subr.bf16.mxu0 %v2743
    %2952 = vmatpush1.bf16.msra.mxu0 %v2742
    %2953 = vmatprep.subr.bf16.mxu0 %v2745
    %2954 = vmatpush1.bf16.msra.mxu0 %v2744
    %2955 = vmatprep.subr.bf16.mxu0 %v2747
    %2956 = vmatpush1.bf16.msra.mxu0 %v2746
    %2957 = vmatprep.subr.bf16.mxu0 %v2749
    %2958 = vmatpush1.bf16.msra.mxu0 %v2748
    %2959 = vmatprep.subr.bf16.mxu0 %v2751
    %2960 = vmatpush1.bf16.msra.mxu0 %v2750
    %2961 = vmatprep.subr.bf16.mxu0 %v2753
    %2962 = vmatpush1.bf16.msra.mxu0 %v2752
    %2963 = vmatprep.subr.bf16.mxu0 %v2755
    %2964 = vmatpush1.bf16.msra.mxu0 %v2754
    %2965 = vmatprep.subr.bf16.mxu0 %v2757
    %2966 = vmatpush1.bf16.msra.mxu0 %v2756
    %2967 = vmatprep.subr.bf16.mxu0 %v2759
    %2968 = vmatpush1.bf16.msra.mxu0 %v2758
    %2969 = vmatprep.subr.bf16.mxu0 %v2761
    %2970 = vmatpush1.bf16.msra.mxu0 %v2760
    %2971 = vmatprep.subr.bf16.mxu0 %v2763
    %2972 = vmatpush1.bf16.msra.mxu0 %v2762
    %2973 = vmatprep.mubr.bf16.mxu0 %v2403
    %2974 = vmatmul.mubr.bf16.gmra.mrb[0].mxu0 %v2402
    %v2975 = vpop.f32.mrb[0].mxu0
    %v2976 = vadd.f32 %v2863, %v2975
    %v2977 = vpop.f32.mrb[0].mxu0
    %v2978 = vadd.f32 %v2865, %v2977
    %v2979 = vpop.f32.mrb[0].mxu0
    %v2980 = vadd.f32 %v2867, %v2979
    %v2981 = vpop.f32.mrb[0].mxu0
    %v2982 = vadd.f32 %v2869, %v2981
    %2983 = vmatprep.mubr.bf16.mxu0 %v2407
    %2984 = vmatmul.mubr.bf16.gmra.mrb[0].mxu0 %v2406
    %v2985 = vpop.f32.mrb[0].mxu0
    %v2986 = vadd.f32 %v2873, %v2985
    %v2987 = vpop.f32.mrb[0].mxu0
    %v2988 = vadd.f32 %v2875, %v2987
    %v2989 = vpop.f32.mrb[0].mxu0
    %v2990 = vadd.f32 %v2877, %v2989
    %v2991 = vpop.f32.mrb[0].mxu0
    %v2992 = vadd.f32 %v2879, %v2991
    %2993 = vmatprep.mubr.bf16.mxu0 %v2411
    %2994 = vmatmul.mubr.bf16.gmra.mrb[0].mxu0 %v2410
    %v2995 = vpop.f32.mrb[0].mxu0
    %v2996 = vadd.f32 %v2883, %v2995
    %v2997 = vpop.f32.mrb[0].mxu0
    %v2998 = vadd.f32 %v2885, %v2997
    %v2999 = vpop.f32.mrb[0].mxu0
    %v3000 = vadd.f32 %v2887, %v2999
    %v3001 = vpop.f32.mrb[0].mxu0
    %v3002 = vadd.f32 %v2889, %v3001
    %3003 = vmatprep.mubr.bf16.mxu0 %v2415
    %3004 = vmatmul.mubr.bf16.gmra.mrb[0].mxu0 %v2414
    %v3005 = vpop.f32.mrb[0].mxu0
    %v3006 = vadd.f32 %v2893, %v3005
    %v3007 = vpop.f32.mrb[0].mxu0
    %v3008 = vadd.f32 %v2895, %v3007
    %v3009 = vpop.f32.mrb[0].mxu0
    %v3010 = vadd.f32 %v2897, %v3009
    %v3011 = vpop.f32.mrb[0].mxu0
    %v3012 = vadd.f32 %v2899, %v3011
    %3013 = vmatprep.mubr.bf16.mxu0 %v2419
    %3014 = vmatmul.mubr.bf16.gmra.mrb[0].mxu0 %v2418
    %v3015 = vpop.f32.mrb[0].mxu0
    %v3016 = vadd.f32 %v2903, %v3015
    %v3017 = vpop.f32.mrb[0].mxu0
    %v3018 = vadd.f32 %v2905, %v3017
    %v3019 = vpop.f32.mrb[0].mxu0
    %v3020 = vadd.f32 %v2907, %v3019
    %v3021 = vpop.f32.mrb[0].mxu0
    %v3022 = vadd.f32 %v2909, %v3021
    %3023 = vmatprep.mubr.bf16.mxu0 %v2423
    %3024 = vmatmul.mubr.bf16.gmra.mrb[0].mxu0 %v2422
    %v3025 = vpop.f32.mrb[0].mxu0
    %v3026 = vadd.f32 %v2913, %v3025
    %v3027 = vpop.f32.mrb[0].mxu0
    %v3028 = vadd.f32 %v2915, %v3027
    %v3029 = vpop.f32.mrb[0].mxu0
    %v3030 = vadd.f32 %v2917, %v3029
    %v3031 = vpop.f32.mrb[0].mxu0
    %v3032 = vadd.f32 %v2919, %v3031
    %3033 = vmatprep.mubr.bf16.mxu0 %v2427
    %3034 = vmatmul.mubr.bf16.gmra.mrb[0].mxu0 %v2426
    %v3035 = vpop.f32.mrb[0].mxu0
    %v3036 = vadd.f32 %v2923, %v3035
    %v3037 = vpop.f32.mrb[0].mxu0
    %v3038 = vadd.f32 %v2925, %v3037
    %v3039 = vpop.f32.mrb[0].mxu0
    %v3040 = vadd.f32 %v2927, %v3039
    %v3041 = vpop.f32.mrb[0].mxu0
    %v3042 = vadd.f32 %v2929, %v3041
    %3043 = vmatprep.mubr.bf16.mxu0 %v2431
    %3044 = vmatmul.mubr.bf16.gmra.mrb[0].mxu0 %v2430
    %v3045 = vpop.f32.mrb[0].mxu0
    %v3046 = vadd.f32 %v2933, %v3045
    %v3047 = vpop.f32.mrb[0].mxu0
    %v3048 = vadd.f32 %v2935, %v3047
    %v3049 = vpop.f32.mrb[0].mxu0
    %v3050 = vadd.f32 %v2937, %v3049
    %v3051 = vpop.f32.mrb[0].mxu0
    %v3052 = vadd.f32 %v2939, %v3051
    %3053 = vdwg.mxu0
    %v3054 = vmax.f32 %v2976, 0.0
    %v3055 = vmax.f32 %v2978, 0.0
    %v3056 = vmax.f32 %v2980, 0.0
    %v3057 = vmax.f32 %v2982, 0.0
    %v3058 = vmax.f32 %v2986, 0.0
    %v3059 = vmax.f32 %v2988, 0.0
    %v3060 = vmax.f32 %v2990, 0.0
    %v3061 = vmax.f32 %v2992, 0.0
    %v3062 = vmax.f32 %v2996, 0.0
    %v3063 = vmax.f32 %v2998, 0.0
    %v3064 = vmax.f32 %v3000, 0.0
    %v3065 = vmax.f32 %v3002, 0.0
    %v3066 = vmax.f32 %v3006, 0.0
    %v3067 = vmax.f32 %v3008, 0.0
    %v3068 = vmax.f32 %v3010, 0.0
    %v3069 = vmax.f32 %v3012, 0.0
    %v3070 = vmax.f32 %v3016, 0.0
    %v3071 = vmax.f32 %v3018, 0.0
    %v3072 = vmax.f32 %v3020, 0.0
    %v3073 = vmax.f32 %v3022, 0.0
    %v3074 = vmax.f32 %v3026, 0.0
    %v3075 = vmax.f32 %v3028, 0.0
    %v3076 = vmax.f32 %v3030, 0.0
    %v3077 = vmax.f32 %v3032, 0.0
    %v3078 = vmax.f32 %v3036, 0.0
    %v3079 = vmax.f32 %v3038, 0.0
    %v3080 = vmax.f32 %v3040, 0.0
    %v3081 = vmax.f32 %v3042, 0.0
    %v3082 = vmax.f32 %v3046, 0.0
    %v3083 = vmax.f32 %v3048, 0.0
    %v3084 = vmax.f32 %v3050, 0.0
    %v3085 = vmax.f32 %v3052, 0.0
    %v3086 = vpack.c.bf16 %v3056, %v3054
    %v3087 = vpack.c.bf16 %v3057, %v3055
    %v3088 = vpack.c.bf16 %v3060, %v3058
    %v3089 = vpack.c.bf16 %v3061, %v3059
    %v3090 = vpack.c.bf16 %v3064, %v3062
    %v3091 = vpack.c.bf16 %v3065, %v3063
    %v3092 = vpack.c.bf16 %v3068, %v3066
    %v3093 = vpack.c.bf16 %v3069, %v3067
    %v3094 = vpack.c.bf16 %v3072, %v3070
    %v3095 = vpack.c.bf16 %v3073, %v3071
    %v3096 = vpack.c.bf16 %v3076, %v3074
    %v3097 = vpack.c.bf16 %v3077, %v3075
    %v3098 = vpack.c.bf16 %v3080, %v3078
    %v3099 = vpack.c.bf16 %v3081, %v3079
    %v3100 = vpack.c.bf16 %v3084, %v3082
    %v3101 = vpack.c.bf16 %v3085, %v3083
    %v3102 = vld [vmem:[%s5] sm:$0xf]
    %v3103 = vld [vmem:[%s5 + $0x4] sm:$0xf]
    %v3104 = vld [vmem:[%s5 + $0x8] sm:$0xf]
    %v3105 = vld [vmem:[%s5 + $0xc] sm:$0xf]
    %v3106 = vld [vmem:[%s5 + $0x10] sm:$0xf]
    %v3107 = vld [vmem:[%s5 + $0x14] sm:$0xf]
    %v3108 = vld [vmem:[%s5 + $0x18] sm:$0xf]
    %v3109 = vld [vmem:[%s5 + $0x1c] sm:$0xf]
    %v3110 = vld [vmem:[%s5 + $0x20] sm:$0xf]
    %v3111 = vld [vmem:[%s5 + $0x24] sm:$0xf]
    %v3112 = vld [vmem:[%s5 + $0x28] sm:$0xf]
    %v3113 = vld [vmem:[%s5 + $0x2c] sm:$0xf]
    %v3114 = vld [vmem:[%s5 + $0x30] sm:$0xf]
    %v3115 = vld [vmem:[%s5 + $0x34] sm:$0xf]
    %v3116 = vld [vmem:[%s5 + $0x38] sm:$0xf]
    %v3117 = vld [vmem:[%s5 + $0x3c] sm:$0xf]
    %v3118 = vld [vmem:[%s5 + $0x40] sm:$0xf]
    %v3119 = vld [vmem:[%s5 + $0x44] sm:$0xf]
    %v3120 = vld [vmem:[%s5 + $0x48] sm:$0xf]
    %v3121 = vld [vmem:[%s5 + $0x4c] sm:$0xf]
    %v3122 = vld [vmem:[%s5 + $0x50] sm:$0xf]
    %v3123 = vld [vmem:[%s5 + $0x54] sm:$0xf]
    %v3124 = vld [vmem:[%s5 + $0x58] sm:$0xf]
    %v3125 = vld [vmem:[%s5 + $0x5c] sm:$0xf]
    %v3126 = vld [vmem:[%s5 + $0x60] sm:$0xf]
    %v3127 = vld [vmem:[%s5 + $0x64] sm:$0xf]
    %v3128 = vld [vmem:[%s5 + $0x68] sm:$0xf]
    %v3129 = vld [vmem:[%s5 + $0x6c] sm:$0xf]
    %v3130 = vld [vmem:[%s5 + $0x70] sm:$0xf]
    %v3131 = vld [vmem:[%s5 + $0x74] sm:$0xf]
    %v3132 = vld [vmem:[%s5 + $0x78] sm:$0xf]
    %v3133 = vld [vmem:[%s5 + $0x7c] sm:$0xf]
    %v3134 = vld [vmem:[%s6] sm:$0x1]
    %v3136 = vlaneseq
    %v3137 = vshrl.u32 %v3136, 7
    %v3138 = vsub.s32 0, %v3137
    %v3139 = vrot.slane %v3134, %v3138
    %v3173 = vunpack.c.l.b16 %v3102
    %v3174 = vunpack.c.l.b16 %v3103
    %v3175 = vunpack.c.l.b16 %v3104
    %v3176 = vunpack.c.l.b16 %v3105
    %v3177 = vunpack.c.l.b16 %v3106
    %v3178 = vunpack.c.l.b16 %v3107
    %v3179 = vunpack.c.l.b16 %v3108
    %v3180 = vunpack.c.l.b16 %v3109
    %v3181 = vunpack.c.l.b16 %v3110
    %v3182 = vunpack.c.l.b16 %v3111
    %v3183 = vunpack.c.l.b16 %v3112
    %v3184 = vunpack.c.l.b16 %v3113
    %v3185 = vunpack.c.l.b16 %v3114
    %v3186 = vunpack.c.l.b16 %v3115
    %v3187 = vunpack.c.l.b16 %v3116
    %v3188 = vunpack.c.l.b16 %v3117
    %v3189 = vunpack.c.l.b16 %v3118
    %v3190 = vunpack.c.l.b16 %v3119
    %v3191 = vunpack.c.l.b16 %v3120
    %v3192 = vunpack.c.l.b16 %v3121
    %v3193 = vunpack.c.l.b16 %v3122
    %v3194 = vunpack.c.l.b16 %v3123
    %v3195 = vunpack.c.l.b16 %v3124
    %v3196 = vunpack.c.l.b16 %v3125
    %v3197 = vunpack.c.l.b16 %v3126
    %v3198 = vunpack.c.l.b16 %v3127
    %v3199 = vunpack.c.l.b16 %v3128
    %v3200 = vunpack.c.l.b16 %v3129
    %v3201 = vunpack.c.l.b16 %v3130
    %v3202 = vunpack.c.l.b16 %v3131
    %v3203 = vunpack.c.l.b16 %v3132
    %v3204 = vunpack.c.l.b16 %v3133
    %v3205 = vpack.c.b16 %v3174, %v3173
    %v3206 = vpack.c.b16 %v3176, %v3175
    %v3207 = vpack.c.b16 %v3178, %v3177
    %v3208 = vpack.c.b16 %v3180, %v3179
    %v3209 = vpack.c.b16 %v3182, %v3181
    %v3210 = vpack.c.b16 %v3184, %v3183
    %v3211 = vpack.c.b16 %v3186, %v3185
    %v3212 = vpack.c.b16 %v3188, %v3187
    %v3213 = vpack.c.b16 %v3190, %v3189
    %v3214 = vpack.c.b16 %v3192, %v3191
    %v3215 = vpack.c.b16 %v3194, %v3193
    %v3216 = vpack.c.b16 %v3196, %v3195
    %v3217 = vpack.c.b16 %v3198, %v3197
    %v3218 = vpack.c.b16 %v3200, %v3199
    %v3219 = vpack.c.b16 %v3202, %v3201
    %v3220 = vpack.c.b16 %v3204, %v3203
    %3237 = vmatprep.subr.bf16.mxu0 0
    %3238 = vmatpush1.bf16.msra.mxu0 %v3205
    %3239 = vmatprep.subr.bf16.mxu0 0
    %3240 = vmatpush1.bf16.msra.mxu0 %v3206
    %3241 = vmatprep.subr.bf16.mxu0 0
    %3242 = vmatpush1.bf16.msra.mxu0 %v3207
    %3243 = vmatprep.subr.bf16.mxu0 0
    %3244 = vmatpush1.bf16.msra.mxu0 %v3208
    %3245 = vmatprep.subr.bf16.mxu0 0
    %3246 = vmatpush1.bf16.msra.mxu0 %v3209
    %3247 = vmatprep.subr.bf16.mxu0 0
    %3248 = vmatpush1.bf16.msra.mxu0 %v3210
    %3249 = vmatprep.subr.bf16.mxu0 0
    %3250 = vmatpush1.bf16.msra.mxu0 %v3211
    %3251 = vmatprep.subr.bf16.mxu0 0
    %3252 = vmatpush1.bf16.msra.mxu0 %v3212
    %3253 = vmatprep.subr.bf16.mxu0 0
    %3254 = vmatpush1.bf16.msra.mxu0 %v3213
    %3255 = vmatprep.subr.bf16.mxu0 0
    %3256 = vmatpush1.bf16.msra.mxu0 %v3214
    %3257 = vmatprep.subr.bf16.mxu0 0
    %3258 = vmatpush1.bf16.msra.mxu0 %v3215
    %3259 = vmatprep.subr.bf16.mxu0 0
    %3260 = vmatpush1.bf16.msra.mxu0 %v3216
    %3261 = vmatprep.subr.bf16.mxu0 0
    %3262 = vmatpush1.bf16.msra.mxu0 %v3217
    %3263 = vmatprep.subr.bf16.mxu0 0
    %3264 = vmatpush1.bf16.msra.mxu0 %v3218
    %3265 = vmatprep.subr.bf16.mxu0 0
    %3266 = vmatpush1.bf16.msra.mxu0 %v3219
    %3267 = vmatprep.subr.bf16.mxu0 0
    %3268 = vmatpush1.bf16.msra.mxu0 %v3220
    %3269 = vmatprep.mubr.bf16.mxu0 %v3087
    %3270 = vmatmul.mubr.bf16.gmra.mrb[0].mxu0 %v3086
    %v3271 = vpop.f32.mrb[0].mxu0
    %v3272 = vadd.f32 %v3139, %v3271
    %v3273 = vpop.f32.mrb[0].mxu0
    %v3274 = vpop.f32.mrb[0].mxu0
    %v3275 = vadd.f32 %v3139, %v3274
    %v3276 = vpop.f32.mrb[0].mxu0
    %3277 = vmatprep.mubr.bf16.mxu0 %v3089
    %3278 = vmatmul.mubr.bf16.gmra.mrb[0].mxu0 %v3088
    %v3279 = vpop.f32.mrb[0].mxu0
    %v3280 = vadd.f32 %v3139, %v3279
    %v3281 = vpop.f32.mrb[0].mxu0
    %v3282 = vpop.f32.mrb[0].mxu0
    %v3283 = vadd.f32 %v3139, %v3282
    %v3284 = vpop.f32.mrb[0].mxu0
    %3285 = vmatprep.mubr.bf16.mxu0 %v3091
    %3286 = vmatmul.mubr.bf16.gmra.mrb[0].mxu0 %v3090
    %v3287 = vpop.f32.mrb[0].mxu0
    %v3288 = vadd.f32 %v3139, %v3287
    %v3289 = vpop.f32.mrb[0].mxu0
    %v3290 = vpop.f32.mrb[0].mxu0
    %v3291 = vadd.f32 %v3139, %v3290
    %v3292 = vpop.f32.mrb[0].mxu0
    %3293 = vmatprep.mubr.bf16.mxu0 %v3093
    %3294 = vmatmul.mubr.bf16.gmra.mrb[0].mxu0 %v3092
    %v3295 = vpop.f32.mrb[0].mxu0
    %v3296 = vadd.f32 %v3139, %v3295
    %v3297 = vpop.f32.mrb[0].mxu0
    %v3298 = vpop.f32.mrb[0].mxu0
    %v3299 = vadd.f32 %v3139, %v3298
    %v3300 = vpop.f32.mrb[0].mxu0
    %3301 = vmatprep.mubr.bf16.mxu0 %v3095
    %3302 = vmatmul.mubr.bf16.gmra.mrb[0].mxu0 %v3094
    %v3303 = vpop.f32.mrb[0].mxu0
    %v3304 = vadd.f32 %v3139, %v3303
    %v3305 = vpop.f32.mrb[0].mxu0
    %v3306 = vpop.f32.mrb[0].mxu0
    %v3307 = vadd.f32 %v3139, %v3306
    %v3308 = vpop.f32.mrb[0].mxu0
    %3309 = vmatprep.mubr.bf16.mxu0 %v3097
    %3310 = vmatmul.mubr.bf16.gmra.mrb[0].mxu0 %v3096
    %v3311 = vpop.f32.mrb[0].mxu0
    %v3312 = vadd.f32 %v3139, %v3311
    %v3313 = vpop.f32.mrb[0].mxu0
    %v3314 = vpop.f32.mrb[0].mxu0
    %v3315 = vadd.f32 %v3139, %v3314
    %v3316 = vpop.f32.mrb[0].mxu0
    %3317 = vmatprep.mubr.bf16.mxu0 %v3099
    %3318 = vmatmul.mubr.bf16.gmra.mrb[0].mxu0 %v3098
    %v3319 = vpop.f32.mrb[0].mxu0
    %v3320 = vadd.f32 %v3139, %v3319
    %v3321 = vpop.f32.mrb[0].mxu0
    %v3322 = vpop.f32.mrb[0].mxu0
    %v3323 = vadd.f32 %v3139, %v3322
    %v3324 = vpop.f32.mrb[0].mxu0
    %3325 = vmatprep.mubr.bf16.mxu0 %v3101
    %3326 = vmatmul.mubr.bf16.gmra.mrb[0].mxu0 %v3100
    %v3327 = vpop.f32.mrb[0].mxu0
    %v3328 = vadd.f32 %v3139, %v3327
    %v3329 = vpop.f32.mrb[0].mxu0
    %v3330 = vpop.f32.mrb[0].mxu0
    %v3331 = vadd.f32 %v3139, %v3330
    %v3332 = vpop.f32.mrb[0].mxu0
    %3333 = vdwg.mxu0
    %v3334 = vpack.c.bf16 %v3275, %v3272
    %v3335 = vpack.c.bf16 %v3283, %v3280
    %v3336 = vpack.c.bf16 %v3291, %v3288
    %v3337 = vpack.c.bf16 %v3299, %v3296
    %v3338 = vpack.c.bf16 %v3307, %v3304
    %v3339 = vpack.c.bf16 %v3315, %v3312
    %v3340 = vpack.c.bf16 %v3323, %v3320
    %v3341 = vpack.c.bf16 %v3331, %v3328
    %v3350 = vunpack.c.l.b16 %v3334
    %v3351 = vunpack.c.h.b16 %v3334
    %v3352 = vunpack.c.l.b16 %v3335
    %v3353 = vunpack.c.h.b16 %v3335
    %v3354 = vunpack.c.l.b16 %v3336
    %v3355 = vunpack.c.h.b16 %v3336
    %v3356 = vunpack.c.l.b16 %v3337
    %v3357 = vunpack.c.h.b16 %v3337
    %v3358 = vunpack.c.l.b16 %v3338
    %v3359 = vunpack.c.h.b16 %v3338
    %v3360 = vunpack.c.l.b16 %v3339
    %v3361 = vunpack.c.h.b16 %v3339
    %v3362 = vunpack.c.l.b16 %v3340
    %v3363 = vunpack.c.h.b16 %v3340
    %v3364 = vunpack.c.l.b16 %v3341
    %v3365 = vunpack.c.h.b16 %v3341
    %v3366 = vpack.c.b16 %v3350, %v3350
    %v3367 = vpack.c.b16 %v3351, %v3351
    %v3368 = vpack.c.b16 %v3352, %v3352
    %v3369 = vpack.c.b16 %v3353, %v3353
    %v3370 = vpack.c.b16 %v3354, %v3354
    %v3371 = vpack.c.b16 %v3355, %v3355
    %v3372 = vpack.c.b16 %v3356, %v3356
    %v3373 = vpack.c.b16 %v3357, %v3357
    %v3374 = vpack.c.b16 %v3358, %v3358
    %v3375 = vpack.c.b16 %v3359, %v3359
    %v3376 = vpack.c.b16 %v3360, %v3360
    %v3377 = vpack.c.b16 %v3361, %v3361
    %v3378 = vpack.c.b16 %v3362, %v3362
    %v3379 = vpack.c.b16 %v3363, %v3363
    %v3380 = vpack.c.b16 %v3364, %v3364
    %v3381 = vpack.c.b16 %v3365, %v3365
    %3398 = vst [vmem:[%s7] sm:$0xf] %v3366
    %3399 = vst [vmem:[%s7 + $0x4] sm:$0xf] %v3367
    %3400 = vst [vmem:[%s7 + $0x8] sm:$0xf] %v3368
    %3401 = vst [vmem:[%s7 + $0xc] sm:$0xf] %v3369
    %3402 = vst [vmem:[%s7 + $0x10] sm:$0xf] %v3370
    %3403 = vst [vmem:[%s7 + $0x14] sm:$0xf] %v3371
    %3404 = vst [vmem:[%s7 + $0x18] sm:$0xf] %v3372
    %3405 = vst [vmem:[%s7 + $0x1c] sm:$0xf] %v3373
    %3406 = vst [vmem:[%s7 + $0x20] sm:$0xf] %v3374
    %3407 = vst [vmem:[%s7 + $0x24] sm:$0xf] %v3375
    %3408 = vst [vmem:[%s7 + $0x28] sm:$0xf] %v3376
    %3409 = vst [vmem:[%s7 + $0x2c] sm:$0xf] %v3377
    %3410 = vst [vmem:[%s7 + $0x30] sm:$0xf] %v3378
    %3411 = vst [vmem:[%s7 + $0x34] sm:$0xf] %v3379
    %3412 = vst [vmem:[%s7 + $0x38] sm:$0xf] %v3380
    %3413 = vst [vmem:[%s7 + $0x3c] sm:$0xf] %v3381
    // Predicated region
    $region34: #{mlp_forward.1} parent=1 // pred_check
      _
    $region35: #{mlp_forward.1} parent=1 // pred_check_branch
      %3415 = sbr.rel (0) target = $region37
    $region36: #{mlp_forward.1} parent=1 // pred_region
      _
    $region37: #{mlp_forward.1} parent=1 // pred_fallthru
      _
    // Predicated region
    $region38: #{mlp_forward.1} parent=1 // pred_check
      _
    $region39: #{mlp_forward.1} parent=1 // pred_check_branch
      %3417 = sbr.rel (0) target = $region41
    $region40: #{mlp_forward.1} parent=1 // pred_region
      _
    $region41: #{mlp_forward.1} parent=1 // pred_fallthru
      _
    %3418 = vsyncpa [#allocation3], 1

</llo_original>
